<compile_context>
chip_gen: v5e
topology: v5e:2x2
jax: 0.10.0
libtpu: 0.0.40
codegen_flags: <defaults>
</compile_context>

<pallas_src>
import functools

import jax
import jax.numpy as jnp
from jax.experimental import pallas as pl
from jax.experimental.pallas import tpu as pltpu

EPS = 1e-5
_MIB = 1024 * 1024
_VMEM_TARGET = 44 * _MIB      # keep well under v7x's 64 MiB physical VMEM
_VMEM_FLOOR = 32 * _MIB       # v5e scoped default is only 16 MiB; always raise it
_VMEM_CEIL = 48 * _MIB


def _round_up(n, m):
    return ((n + m - 1) // m) * m


def _conv_module_kernel(
    x_ref,        # (TT, C)   input tile (batch dim squeezed)
    g1_ref,       # (1, C)    layer_norm1 gamma
    b1_ref,       # (1, C)    layer_norm1 beta
    w1a_ref,      # (C, H)    pointwise_conv1 "value" half, bf16
    w1g_ref,      # (C, H)    pointwise_conv1 "gate" half, bf16
    pb1a_ref,     # (1, H)    pointwise_conv1 bias (value half)
    pb1g_ref,     # (1, H)    pointwise_conv1 bias (gate half)
    wd_ref,       # (K, H)    depthwise weights, tap-major
    bd_ref,       # (1, H)    depthwise bias
    g2_ref,       # (1, H)    layer_norm2 gamma
    b2_ref,       # (1, H)    layer_norm2 beta
    w2_ref,       # (H, C)    pointwise_conv2 weight, bf16
    pb2_ref,      # (1, C)    pointwise_conv2 bias
    o_ref,        # (TT, C)   output tile (batch dim squeezed)
    zpad_ref,     # (P + TT, H) f32 persistent scratch (depthwise halo carry)
    *,
    kernel_size,
    hidden,
    tile_t,
    pad_rows,
):
    K = kernel_size
    H = hidden
    TT = tile_t
    P = pad_rows  # round_up(K-1, 8): z lives at rows [P, P+TT); halo at [P-(K-1), P)

    # NOTE: the halo carry requires the grid to be batch-outer / time-inner with the
    # time axis executed sequentially per batch element ("arbitrary" semantics below).
    if K > 1:
        @pl.when(pl.program_id(1) == 0)
        def _():
            # Zero rows [0, P) (sublane-aligned store; includes the K-1 halo rows).
            zpad_ref[pl.ds(0, P), :] = jnp.zeros((P, H), jnp.float32)

    x = x_ref[...].astype(jnp.float32)               # (TT, C)

    # ---- layer_norm1 (timewise LN over channels), single-pass stats, f32 ----
    inv_c = 1.0 / x.shape[-1]
    mean1 = jnp.sum(x, axis=-1, keepdims=True) * inv_c
    ex2_1 = jnp.sum(x * x, axis=-1, keepdims=True) * inv_c
    var1 = jnp.maximum(ex2_1 - mean1 * mean1, 0.0)
    xn = (x - mean1) * jax.lax.rsqrt(var1 + EPS)
    xn = xn * g1_ref[...] + b1_ref[...]

    # ---- pointwise_conv1 (two (C,H) bf16 matmuls, f32 acc) + GLU ----
    xn_bf = xn.astype(jnp.bfloat16)
    a = jnp.dot(xn_bf, w1a_ref[...], preferred_element_type=jnp.float32) + pb1a_ref[...]
    g = jnp.dot(xn_bf, w1g_ref[...], preferred_element_type=jnp.float32) + pb1g_ref[...]
    z = a * jax.nn.sigmoid(g)                        # (TT, H) f32

    # ---- causal depthwise conv via sublane-aligned padded persistent scratch ----
    wd = wd_ref[...]                                 # (K, H): single read, sliced in regs
    if K > 1:
        zpad_ref[pl.ds(P, TT), :] = z                # aligned store (P % 8 == 0)
    # d = 0 tap straight from registers, bias folded in.
    acc = z * wd[K - 1:K, :] + bd_ref[...]
    base = P - (K - 1)
    for k in range(K - 1):                           # remaining taps: static slices
        acc = acc + zpad_ref[pl.ds(base + k, TT), :] * wd[k:k + 1, :]
    if K > 1:
        # Carry halo: last K-1 rows of this tile's z feed the next time-tile.
        zpad_ref[pl.ds(base, K - 1), :] = zpad_ref[pl.ds(P + TT - (K - 1), K - 1), :]

    # ---- layer_norm2 + swish, single-pass stats (f32) ----
    inv_h = 1.0 / H
    mean2 = jnp.sum(acc, axis=-1, keepdims=True) * inv_h
    ex2_2 = jnp.sum(acc * acc, axis=-1, keepdims=True) * inv_h
    var2 = jnp.maximum(ex2_2 - mean2 * mean2, 0.0)
    u = (acc - mean2) * jax.lax.rsqrt(var2 + EPS)
    u = u * g2_ref[...] + b2_ref[...]
    u = u * jax.nn.sigmoid(u)                        # SiLU

    # ---- pointwise_conv2 (bf16 matmul, f32 acc) ----
    out = jnp.dot(u.astype(jnp.bfloat16), w2_ref[...],
                  preferred_element_type=jnp.float32) + pb2_ref[...]
    # dropout: identity (inference)
    o_ref[...] = out.astype(o_ref.dtype)


def _vmem_bytes(tt, C, H, K, P):
    """Rough VMEM footprint estimate used to size tile_t / vmem_limit_bytes."""
    f32, bf16 = 4, 2
    io = 2 * 2 * tt * C * f32              # x + out tiles, double-buffered
    wts = 3 * C * H * bf16                 # w1a + w1g + w2, single-buffered
    small = (K * H + 8 * H + 6 * C) * f32  # biases + LN affines
    scratch = (P + tt) * H * f32           # halo scratch
    temps = 8 * tt * max(C, H) * f32       # allowance for compiler temporaries
    return io + wts + small + scratch + temps


def causal_convolution_module(x, params, *, kernel_size, tile_t=512,
                              single_buffer_consts=True):
    """x: (B, T, C). Returns (B, T, C) in x.dtype (bf16 IO supported).

    NOTE: for best MXU/vst efficiency C and H should be multiples of 128 and the time
    tile a multiple of 16 (bf16 sublane packing); pad channels in the caller if needed.
    """
    B, T, C = x.shape
    K = kernel_size
    H = params["wd"].shape[1]
    assert params["wd"].shape[0] == K

    P = _round_up(K - 1, 8) if K > 1 else 0

    TT = min(tile_t, T)
    assert T % TT == 0, "time length must be divisible by the time tile"
    # Auto-shrink the time tile if the estimated VMEM footprint exceeds the v7x-safe
    # ceiling (v7x has 64 MiB physical VMEM vs 128 MiB on v5e/v6e).
    while (_vmem_bytes(TT, C, H, K, P) > _VMEM_TARGET
           and TT >= 128 and TT % 2 == 0
           and T % (TT // 2) == 0 and TT // 2 >= max(K - 1, 8)):
        TT //= 2
    assert TT % 8 == 0 or TT == T, "time tile must be sublane-aligned"
    # Halo carry holds only the previous tile's last K-1 rows -> tile must cover the halo.
    assert TT >= K - 1, "time tile must be >= kernel_size - 1 (depthwise halo)"
    nT = T // TT

    vmem_limit = int(min(_VMEM_CEIL, max(_VMEM_FLOOR, 1.25 * _vmem_bytes(TT, C, H, K, P))))

    # Split pointwise_conv1 into value/gate halves and pre-cast matmul weights to bf16.
    w1a = params["w1_t"][:, :H].astype(jnp.bfloat16)
    w1g = params["w1_t"][:, H:].astype(jnp.bfloat16)
    pb1a = params["pb1"][:, :H]
    pb1g = params["pb1"][:, H:]
    w2 = params["w2_t"].astype(jnp.bfloat16)

    kern = functools.partial(
        _conv_module_kernel, kernel_size=K, hidden=H, tile_t=TT, pad_rows=P
    )

    args = (
        x,
        params["g1"], params["b1"],
        w1a, w1g, pb1a, pb1g,
        params["wd"], params["bd"],
        params["g2"], params["b2"],
        w2, params["pb2"],
    )

    def _build(use_single_buffer):
        def const(shape):
            kw = {}
            if use_single_buffer:
                # Constant block index -> second pipeline buffer is pure VMEM waste.
                kw["pipeline_mode"] = pl.Buffered(1)
            return pl.BlockSpec(shape, lambda b, t: (0,) * len(shape), **kw)

        grid_spec = pltpu.PrefetchScalarGridSpec(
            num_scalar_prefetch=0,
            grid=(B, nT),
            in_specs=[
                # squeezed batch dim -> kernel sees a (TT, C) ref
                pl.BlockSpec((None, TT, C), lambda b, t: (b, t, 0)),
                const((1, C)),      # gamma1
                const((1, C)),      # beta1
                const((C, H)),      # W1a^T (bf16)
                const((C, H)),      # W1g^T (bf16)
                const((1, H)),      # pw1 bias a
                const((1, H)),      # pw1 bias g
                const((K, H)),      # depthwise weights
                const((1, H)),      # depthwise bias
                const((1, H)),      # gamma2
                const((1, H)),      # beta2
                const((H, C)),      # W2^T (bf16)
                const((1, C)),      # pw2 bias
            ],
            out_specs=pl.BlockSpec((None, TT, C), lambda b, t: (b, t, 0)),
            scratch_shapes=[pltpu.VMEM((P + TT, H), jnp.float32)],
        )
        return pl.pallas_call(
            kern,
            out_shape=jax.ShapeDtypeStruct((B, T, C), x.dtype),
            grid_spec=grid_spec,
            compiler_params=pltpu.CompilerParams(
                # Time axis carries the depthwise halo in scratch -> must stay
                # sequential ("arbitrary") and time-inner. Do not reorder the grid.
                dimension_semantics=("parallel", "arbitrary"),
                vmem_limit_bytes=vmem_limit,
            ),
        )

    try:
        return _build(single_buffer_consts)(*args)
    except Exception:
        if not single_buffer_consts:
            raise
        # Fallback if this Pallas build rejects single-buffered (Buffered(1)) specs.
        return _build(False)(*args)


def _reference(x, params, kernel_size):
    """Pure-JAX reference mirroring the PyTorch forward (eval mode).

    Matmuls use the same bf16-weight / bf16-activation, f32-accumulation recipe as the
    kernel so the comparison isolates structural differences, not dtype choice.
    """
    B, T, C = x.shape
    H = params["wd"].shape[1]
    w1a = params["w1_t"][:, :H].astype(jnp.bfloat16)
    w1g = params["w1_t"][:, H:].astype(jnp.bfloat16)
    w2 = params["w2_t"].astype(jnp.bfloat16)

    mean1 = jnp.mean(x, axis=-1, keepdims=True)
    var1 = jnp.mean((x - mean1) ** 2, axis=-1, keepdims=True)
    xn = (x - mean1) / jnp.sqrt(var1 + EPS) * params["g1"] + params["b1"]
    xnb = xn.astype(jnp.bfloat16)
    a = jnp.einsum("btc,ch->bth", xnb, w1a,
                   preferred_element_type=jnp.float32) + params["pb1"][:, :H]
    g = jnp.einsum("btc,ch->bth", xnb, w1g,
                   preferred_element_type=jnp.float32) + params["pb1"][:, H:]
    z = a * jax.nn.sigmoid(g)
    acc = jnp.broadcast_to(params["bd"], (B, T, H)).astype(jnp.float32)
    for k in range(kernel_size):
        d = kernel_size - 1 - k
        shifted = jnp.pad(z, ((0, 0), (d, 0), (0, 0)))[:, :T, :]
        acc = acc + shifted * params["wd"][k][None, None, :]
    mean2 = jnp.mean(acc, axis=-1, keepdims=True)
    var2 = jnp.mean((acc - mean2) ** 2, axis=-1, keepdims=True)
    u = (acc - mean2) / jnp.sqrt(var2 + EPS) * params["g2"] + params["b2"]
    u = u * jax.nn.sigmoid(u)
    return jnp.einsum("bth,hc->btc", u.astype(jnp.bfloat16), w2,
                      preferred_element_type=jnp.float32) + params["pb2"]


def init_params(key, input_channels, hidden_channels, kernel_size):
    ks = jax.random.split(key, 8)
    C, H, K = input_channels, hidden_channels, kernel_size
    scale = 0.1
    return {
        # layer_norm1 affine
        "g1": jnp.ones((1, C), jnp.float32),
        "b1": jnp.zeros((1, C), jnp.float32),
        # pointwise_conv1: torch weight (2H, C, 1) -> transposed (C, 2H)
        "w1_t": scale * jax.random.normal(ks[0], (C, 2 * H), jnp.float32),
        "pb1": scale * jax.random.normal(ks[1], (1, 2 * H), jnp.float32),
        # depthwise conv: torch weight (H, 1, K) -> tap-major (K, H)
        "wd": scale * jax.random.normal(ks[2], (K, H), jnp.float32),
        "bd": scale * jax.random.normal(ks[3], (1, H), jnp.float32),
        # layer_norm2 affine
        "g2": jnp.ones((1, H), jnp.float32)
        + scale * jax.random.normal(ks[4], (1, H), jnp.float32),
        "b2": scale * jax.random.normal(ks[5], (1, H), jnp.float32),
        # pointwise_conv2: torch weight (C, H, 1) -> transposed (H, C)
        "w2_t": scale * jax.random.normal(ks[6], (H, C), jnp.float32),
        "pb2": scale * jax.random.normal(ks[7], (1, C), jnp.float32),
    }


if __name__ == "__main__":
    B, T = 2, 32
    input_channels, hidden_channels, depthwise_kernel_size = 16, 32, 3
    tile_t = 16  # small tile so the demo exercises the halo-carry path (T // tile_t = 2)

    key = jax.random.PRNGKey(0)
    kx, kp = jax.random.split(key)
    x = jax.random.normal(kx, (B, T, input_channels), jnp.float32)
    params = init_params(kp, input_channels, hidden_channels, depthwise_kernel_size)

    out = causal_convolution_module(
        x, params, kernel_size=depthwise_kernel_size, tile_t=tile_t
    )
    out = jax.block_until_ready(out)

    ref = _reference(x, params, depthwise_kernel_size)
    assert out.shape == (B, T, input_channels)
    assert jnp.allclose(out, ref, atol=2e-2, rtol=2e-2), "mismatch vs reference"
    print("KERNEL_OK")
</pallas_src>

<mosaic_0001>
module attributes {stable_mosaic.version = 11 : i64} {
  func.func @_conv_module_kernel(%arg0: i32, %arg1: i32, %arg2: memref<1x16x16xf32, #tpu.memory_space<vmem>>, %arg3: memref<1x16xf32, #tpu.memory_space<vmem>>, %arg4: memref<1x16xf32, #tpu.memory_space<vmem>>, %arg5: memref<16x32xbf16, #tpu.memory_space<vmem>>, %arg6: memref<16x32xbf16, #tpu.memory_space<vmem>>, %arg7: memref<1x32xf32, #tpu.memory_space<vmem>>, %arg8: memref<1x32xf32, #tpu.memory_space<vmem>>, %arg9: memref<3x32xf32, #tpu.memory_space<vmem>>, %arg10: memref<1x32xf32, #tpu.memory_space<vmem>>, %arg11: memref<1x32xf32, #tpu.memory_space<vmem>>, %arg12: memref<1x32xf32, #tpu.memory_space<vmem>>, %arg13: memref<32x16xbf16, #tpu.memory_space<vmem>>, %arg14: memref<1x16xf32, #tpu.memory_space<vmem>>, %arg15: memref<1x16x16xf32, #tpu.memory_space<vmem>>, %arg16: memref<24x32xf32, #tpu.memory_space<vmem>>) attributes {dimension_semantics = [#tpu.dimension_semantics<parallel>, #tpu.dimension_semantics<arbitrary>], iteration_bounds = array<i64: 2, 2>, scalar_prefetch = 0 : i64, scratch_operands = 1 : i64, tpu.core_type = #tpu.core_type<tc>, window_params = [{transform_indices = @transform_0, window_bounds = array<i64: 1, 16, 16>}, {pipeline_mode = #tpu.pipeline_mode<synchronous>, transform_indices = @transform_1, window_bounds = array<i64: 1, 16>}, {pipeline_mode = #tpu.pipeline_mode<synchronous>, transform_indices = @transform_2, window_bounds = array<i64: 1, 16>}, {pipeline_mode = #tpu.pipeline_mode<synchronous>, transform_indices = @transform_3, window_bounds = array<i64: 16, 32>}, {pipeline_mode = #tpu.pipeline_mode<synchronous>, transform_indices = @transform_4, window_bounds = array<i64: 16, 32>}, {pipeline_mode = #tpu.pipeline_mode<synchronous>, transform_indices = @transform_5, window_bounds = array<i64: 1, 32>}, {pipeline_mode = #tpu.pipeline_mode<synchronous>, transform_indices = @transform_6, window_bounds = array<i64: 1, 32>}, {pipeline_mode = #tpu.pipeline_mode<synchronous>, transform_indices = @transform_7, window_bounds = array<i64: 3, 32>}, {pipeline_mode = #tpu.pipeline_mode<synchronous>, transform_indices = @transform_8, window_bounds = array<i64: 1, 32>}, {pipeline_mode = #tpu.pipeline_mode<synchronous>, transform_indices = @transform_9, window_bounds = array<i64: 1, 32>}, {pipeline_mode = #tpu.pipeline_mode<synchronous>, transform_indices = @transform_10, window_bounds = array<i64: 1, 32>}, {pipeline_mode = #tpu.pipeline_mode<synchronous>, transform_indices = @transform_11, window_bounds = array<i64: 32, 16>}, {pipeline_mode = #tpu.pipeline_mode<synchronous>, transform_indices = @transform_12, window_bounds = array<i64: 1, 16>}, {transform_indices = @transform_13, window_bounds = array<i64: 1, 16, 16>}]} {
    %c0_i32 = arith.constant 0 : i32
    %0 = arith.cmpi eq, %arg1, %c0_i32 : i32
    %1 = arith.extui %0 : i1 to i32
    %c0_i32_0 = arith.constant 0 : i32
    %2 = arith.cmpi ne, %1, %c0_i32_0 : i32
    scf.if %2 {
      %cst_52 = arith.constant 0.000000e+00 : f32
      %109 = vector.broadcast %cst_52 : f32 to vector<8x32xf32>
      %c0_53 = arith.constant 0 : index
      %c0_54 = arith.constant 0 : index
      %110 = vector.load %arg16[%c0_53, %c0_54] : memref<24x32xf32, #tpu.memory_space<vmem>>, vector<8x32xf32>
      tpu.vector_store %arg16[%c0_53, %c0_54], %109 {strides = array<i32>} : memref<24x32xf32, #tpu.memory_space<vmem>>, vector<8x32xf32>,
    } else {
    }
    %c0 = arith.constant 0 : index
    %c0_1 = arith.constant 0 : index
    %c0_2 = arith.constant 0 : index
    %3 = vector.load %arg2[%c0, %c0_1, %c0_2] : memref<1x16x16xf32, #tpu.memory_space<vmem>>, vector<1x16x16xf32>
    %4 = vector.shape_cast %3 : vector<1x16x16xf32> to vector<16x16xf32>
    %cst = arith.constant dense<0.000000e+00> : vector<16xf32>
    %5 = vector.multi_reduction <add>, %4, %cst [1] : vector<16x16xf32> to vector<16xf32>
    %6 = vector.shape_cast %5 : vector<16xf32> to vector<16x1xf32>
    %cst_3 = arith.constant 6.250000e-02 : f32
    %7 = vector.broadcast %cst_3 : f32 to vector<16x1xf32>
    %8 = arith.mulf %6, %7 : vector<16x1xf32>
    %9 = arith.mulf %4, %4 : vector<16x16xf32>
    %cst_4 = arith.constant dense<0.000000e+00> : vector<16xf32>
    %10 = vector.multi_reduction <add>, %9, %cst_4 [1] : vector<16x16xf32> to vector<16xf32>
    %11 = vector.shape_cast %10 : vector<16xf32> to vector<16x1xf32>
    %cst_5 = arith.constant 6.250000e-02 : f32
    %12 = vector.broadcast %cst_5 : f32 to vector<16x1xf32>
    %13 = arith.mulf %11, %12 : vector<16x1xf32>
    %14 = arith.mulf %8, %8 : vector<16x1xf32>
    %15 = arith.subf %13, %14 : vector<16x1xf32>
    %cst_6 = arith.constant 0.000000e+00 : f32
    %16 = vector.broadcast %cst_6 : f32 to vector<16x1xf32>
    %17 = arith.maximumf %15, %16 : vector<16x1xf32>
    %18 = vector.broadcast %8 : vector<16x1xf32> to vector<16x16xf32>
    %19 = arith.subf %4, %18 : vector<16x16xf32>
    %cst_7 = arith.constant 9.99999974E-6 : f32
    %20 = vector.broadcast %cst_7 : f32 to vector<16x1xf32>
    %21 = arith.addf %17, %20 : vector<16x1xf32>
    %22 = math.rsqrt %21 : vector<16x1xf32>
    %23 = vector.broadcast %22 : vector<16x1xf32> to vector<16x16xf32>
    %24 = arith.mulf %19, %23 : vector<16x16xf32>
    %c0_8 = arith.constant 0 : index
    %c0_9 = arith.constant 0 : index
    %25 = vector.load %arg3[%c0_8, %c0_9] : memref<1x16xf32, #tpu.memory_space<vmem>>, vector<1x16xf32>
    %26 = vector.broadcast %25 : vector<1x16xf32> to vector<16x16xf32>
    %27 = arith.mulf %24, %26 : vector<16x16xf32>
    %c0_10 = arith.constant 0 : index
    %c0_11 = arith.constant 0 : index
    %28 = vector.load %arg4[%c0_10, %c0_11] : memref<1x16xf32, #tpu.memory_space<vmem>>, vector<1x16xf32>
    %29 = vector.broadcast %28 : vector<1x16xf32> to vector<16x16xf32>
    %30 = arith.addf %27, %29 : vector<16x16xf32>
    %31 = arith.truncf %30 : vector<16x16xf32> to vector<16x16xbf16>
    %c0_12 = arith.constant 0 : index
    %c0_13 = arith.constant 0 : index
    %32 = vector.load %arg5[%c0_12, %c0_13] : memref<16x32xbf16, #tpu.memory_space<vmem>>, vector<16x32xbf16>
    %cst_14 = arith.constant dense<0.000000e+00> : vector<16x32xf32>
    %33 = tpu.matmul %31, %32, %cst_14 {dimension_numbers = #tpu.dot_dimension_numbers<[1], [0], [0], [1], [0, 0, 1, 1], [], []>} : vector<16x16xbf16>, vector<16x32xbf16>, vector<16x32xf32> -> vector<16x32xf32>
    %c0_15 = arith.constant 0 : index
    %c0_16 = arith.constant 0 : index
    %34 = vector.load %arg7[%c0_15, %c0_16] : memref<1x32xf32, #tpu.memory_space<vmem>>, vector<1x32xf32>
    %35 = vector.broadcast %34 : vector<1x32xf32> to vector<16x32xf32>
    %36 = arith.addf %33, %35 : vector<16x32xf32>
    %c0_17 = arith.constant 0 : index
    %c0_18 = arith.constant 0 : index
    %37 = vector.load %arg6[%c0_17, %c0_18] : memref<16x32xbf16, #tpu.memory_space<vmem>>, vector<16x32xbf16>
    %cst_19 = arith.constant dense<0.000000e+00> : vector<16x32xf32>
    %38 = tpu.matmul %31, %37, %cst_19 {dimension_numbers = #tpu.dot_dimension_numbers<[1], [0], [0], [1], [0, 0, 1, 1], [], []>} : vector<16x16xbf16>, vector<16x32xbf16>, vector<16x32xf32> -> vector<16x32xf32>
    %c0_20 = arith.constant 0 : index
    %c0_21 = arith.constant 0 : index
    %39 = vector.load %arg8[%c0_20, %c0_21] : memref<1x32xf32, #tpu.memory_space<vmem>>, vector<1x32xf32>
    %40 = vector.broadcast %39 : vector<1x32xf32> to vector<16x32xf32>
    %41 = arith.addf %38, %40 : vector<16x32xf32>
    %42 = arith.negf %41 : vector<16x32xf32>
    %43 = math.exp %42 : vector<16x32xf32>
    %cst_22 = arith.constant 1.000000e+00 : f32
    %44 = vector.broadcast %cst_22 : f32 to vector<16x32xf32>
    %45 = arith.addf %44, %43 : vector<16x32xf32>
    %46 = arith.divf %44, %45 : vector<16x32xf32>
    %47 = arith.mulf %36, %46 : vector<16x32xf32>
    %c0_23 = arith.constant 0 : index
    %c0_24 = arith.constant 0 : index
    %48 = vector.load %arg9[%c0_23, %c0_24] : memref<3x32xf32, #tpu.memory_space<vmem>>, vector<3x32xf32>
    %c8 = arith.constant 8 : index
    %c0_25 = arith.constant 0 : index
    %49 = vector.load %arg16[%c8, %c0_25] : memref<24x32xf32, #tpu.memory_space<vmem>>, vector<16x32xf32>
    tpu.vector_store %arg16[%c8, %c0_25], %47 {strides = array<i32>} : memref<24x32xf32, #tpu.memory_space<vmem>>, vector<16x32xf32>,
    %50 = vector.extract_strided_slice %48 {offsets = [2, 0], sizes = [1, 32], strides = [1, 1]} : vector<3x32xf32> to vector<1x32xf32>
    %51 = vector.broadcast %50 : vector<1x32xf32> to vector<16x32xf32>
    %52 = arith.mulf %47, %51 : vector<16x32xf32>
    %c0_26 = arith.constant 0 : index
    %c0_27 = arith.constant 0 : index
    %53 = vector.load %arg10[%c0_26, %c0_27] : memref<1x32xf32, #tpu.memory_space<vmem>>, vector<1x32xf32>
    %54 = vector.broadcast %53 : vector<1x32xf32> to vector<16x32xf32>
    %55 = arith.addf %52, %54 : vector<16x32xf32>
    %c6 = arith.constant 6 : index
    %c0_28 = arith.constant 0 : index
    %56 = vector.load %arg16[%c6, %c0_28] : memref<24x32xf32, #tpu.memory_space<vmem>>, vector<16x32xf32>
    %57 = vector.extract_strided_slice %48 {offsets = [0, 0], sizes = [1, 32], strides = [1, 1]} : vector<3x32xf32> to vector<1x32xf32>
    %58 = vector.broadcast %57 : vector<1x32xf32> to vector<16x32xf32>
    %59 = arith.mulf %56, %58 : vector<16x32xf32>
    %60 = arith.addf %55, %59 : vector<16x32xf32>
    %c7 = arith.constant 7 : index
    %c0_29 = arith.constant 0 : index
    %61 = vector.load %arg16[%c7, %c0_29] : memref<24x32xf32, #tpu.memory_space<vmem>>, vector<16x32xf32>
    %62 = vector.extract_strided_slice %48 {offsets = [1, 0], sizes = [1, 32], strides = [1, 1]} : vector<3x32xf32> to vector<1x32xf32>
    %63 = vector.broadcast %62 : vector<1x32xf32> to vector<16x32xf32>
    %64 = arith.mulf %61, %63 : vector<16x32xf32>
    %65 = arith.addf %60, %64 : vector<16x32xf32>
    %c22 = arith.constant 22 : index
    %c0_30 = arith.constant 0 : index
    %66 = vector.load %arg16[%c22, %c0_30] : memref<24x32xf32, #tpu.memory_space<vmem>>, vector<2x32xf32>
    %c6_31 = arith.constant 6 : index
    %c0_32 = arith.constant 0 : index
    %67 = vector.load %arg16[%c6_31, %c0_32] : memref<24x32xf32, #tpu.memory_space<vmem>>, vector<2x32xf32>
    tpu.vector_store %arg16[%c6_31, %c0_32], %66 {strides = array<i32>} : memref<24x32xf32, #tpu.memory_space<vmem>>, vector<2x32xf32>,
    %cst_33 = arith.constant dense<0.000000e+00> : vector<16xf32>
    %68 = vector.multi_reduction <add>, %65, %cst_33 [1] : vector<16x32xf32> to vector<16xf32>
    %69 = vector.shape_cast %68 : vector<16xf32> to vector<16x1xf32>
    %cst_34 = arith.constant 3.125000e-02 : f32
    %70 = vector.broadcast %cst_34 : f32 to vector<16x1xf32>
    %71 = arith.mulf %69, %70 : vector<16x1xf32>
    %72 = arith.mulf %65, %65 : vector<16x32xf32>
    %cst_35 = arith.constant dense<0.000000e+00> : vector<16xf32>
    %73 = vector.multi_reduction <add>, %72, %cst_35 [1] : vector<16x32xf32> to vector<16xf32>
    %74 = vector.shape_cast %73 : vector<16xf32> to vector<16x1xf32>
    %cst_36 = arith.constant 3.125000e-02 : f32
    %75 = vector.broadcast %cst_36 : f32 to vector<16x1xf32>
    %76 = arith.mulf %74, %75 : vector<16x1xf32>
    %77 = arith.mulf %71, %71 : vector<16x1xf32>
    %78 = arith.subf %76, %77 : vector<16x1xf32>
    %cst_37 = arith.constant 0.000000e+00 : f32
    %79 = vector.broadcast %cst_37 : f32 to vector<16x1xf32>
    %80 = arith.maximumf %78, %79 : vector<16x1xf32>
    %81 = vector.broadcast %71 : vector<16x1xf32> to vector<16x32xf32>
    %82 = arith.subf %65, %81 : vector<16x32xf32>
    %cst_38 = arith.constant 9.99999974E-6 : f32
    %83 = vector.broadcast %cst_38 : f32 to vector<16x1xf32>
    %84 = arith.addf %80, %83 : vector<16x1xf32>
    %85 = math.rsqrt %84 : vector<16x1xf32>
    %86 = vector.broadcast %85 : vector<16x1xf32> to vector<16x32xf32>
    %87 = arith.mulf %82, %86 : vector<16x32xf32>
    %c0_39 = arith.constant 0 : index
    %c0_40 = arith.constant 0 : index
    %88 = vector.load %arg11[%c0_39, %c0_40] : memref<1x32xf32, #tpu.memory_space<vmem>>, vector<1x32xf32>
    %89 = vector.broadcast %88 : vector<1x32xf32> to vector<16x32xf32>
    %90 = arith.mulf %87, %89 : vector<16x32xf32>
    %c0_41 = arith.constant 0 : index
    %c0_42 = arith.constant 0 : index
    %91 = vector.load %arg12[%c0_41, %c0_42] : memref<1x32xf32, #tpu.memory_space<vmem>>, vector<1x32xf32>
    %92 = vector.broadcast %91 : vector<1x32xf32> to vector<16x32xf32>
    %93 = arith.addf %90, %92 : vector<16x32xf32>
    %94 = arith.negf %93 : vector<16x32xf32>
    %95 = math.exp %94 : vector<16x32xf32>
    %cst_43 = arith.constant 1.000000e+00 : f32
    %96 = vector.broadcast %cst_43 : f32 to vector<16x32xf32>
    %97 = arith.addf %96, %95 : vector<16x32xf32>
    %98 = arith.divf %96, %97 : vector<16x32xf32>
    %99 = arith.mulf %93, %98 : vector<16x32xf32>
    %100 = arith.truncf %99 : vector<16x32xf32> to vector<16x32xbf16>
    %c0_44 = arith.constant 0 : index
    %c0_45 = arith.constant 0 : index
    %101 = vector.load %arg13[%c0_44, %c0_45] : memref<32x16xbf16, #tpu.memory_space<vmem>>, vector<32x16xbf16>
    %cst_46 = arith.constant dense<0.000000e+00> : vector<16x16xf32>
    %102 = tpu.matmul %100, %101, %cst_46 {dimension_numbers = #tpu.dot_dimension_numbers<[1], [0], [0], [1], [0, 0, 1, 1], [], []>} : vector<16x32xbf16>, vector<32x16xbf16>, vector<16x16xf32> -> vector<16x16xf32>
    %c0_47 = arith.constant 0 : index
    %c0_48 = arith.constant 0 : index
    %103 = vector.load %arg14[%c0_47, %c0_48] : memref<1x16xf32, #tpu.memory_space<vmem>>, vector<1x16xf32>
    %104 = vector.broadcast %103 : vector<1x16xf32> to vector<16x16xf32>
    %105 = arith.addf %102, %104 : vector<16x16xf32>
    %c0_49 = arith.constant 0 : index
    %c0_50 = arith.constant 0 : index
    %c0_51 = arith.constant 0 : index
    %106 = vector.load %arg15[%c0_49, %c0_50, %c0_51] : memref<1x16x16xf32, #tpu.memory_space<vmem>>, vector<1x16x16xf32>
    %107 = vector.shape_cast %106 : vector<1x16x16xf32> to vector<16x16xf32>
    %108 = vector.shape_cast %105 : vector<16x16xf32> to vector<1x16x16xf32>
    tpu.vector_store %arg15[%c0_49, %c0_50, %c0_51], %108 {strides = array<i32>} : memref<1x16x16xf32, #tpu.memory_space<vmem>>, vector<1x16x16xf32>,
    return
  }
  func.func @transform_0(%arg0: i32, %arg1: i32) -> (i32, i32, i32) {
    %c0_i32 = arith.constant 0 : i32
    %c0_i32_0 = arith.constant 0 : i32
    return %arg0, %arg1, %c0_i32 : i32, i32, i32
  }
  func.func @transform_1(%arg0: i32, %arg1: i32) -> (i32, i32) {
    %c0_i32 = arith.constant 0 : i32
    %c0_i32_0 = arith.constant 0 : i32
    %c0_i32_1 = arith.constant 0 : i32
    return %c0_i32, %c0_i32_0 : i32, i32
  }
  func.func @transform_2(%arg0: i32, %arg1: i32) -> (i32, i32) {
    %c0_i32 = arith.constant 0 : i32
    %c0_i32_0 = arith.constant 0 : i32
    %c0_i32_1 = arith.constant 0 : i32
    return %c0_i32, %c0_i32_0 : i32, i32
  }
  func.func @transform_3(%arg0: i32, %arg1: i32) -> (i32, i32) {
    %c0_i32 = arith.constant 0 : i32
    %c0_i32_0 = arith.constant 0 : i32
    %c0_i32_1 = arith.constant 0 : i32
    return %c0_i32, %c0_i32_0 : i32, i32
  }
  func.func @transform_4(%arg0: i32, %arg1: i32) -> (i32, i32) {
    %c0_i32 = arith.constant 0 : i32
    %c0_i32_0 = arith.constant 0 : i32
    %c0_i32_1 = arith.constant 0 : i32
    return %c0_i32, %c0_i32_0 : i32, i32
  }
  func.func @transform_5(%arg0: i32, %arg1: i32) -> (i32, i32) {
    %c0_i32 = arith.constant 0 : i32
    %c0_i32_0 = arith.constant 0 : i32
    %c0_i32_1 = arith.constant 0 : i32
    return %c0_i32, %c0_i32_0 : i32, i32
  }
  func.func @transform_6(%arg0: i32, %arg1: i32) -> (i32, i32) {
    %c0_i32 = arith.constant 0 : i32
    %c0_i32_0 = arith.constant 0 : i32
    %c0_i32_1 = arith.constant 0 : i32
    return %c0_i32, %c0_i32_0 : i32, i32
  }
  func.func @transform_7(%arg0: i32, %arg1: i32) -> (i32, i32) {
    %c0_i32 = arith.constant 0 : i32
    %c0_i32_0 = arith.constant 0 : i32
    %c0_i32_1 = arith.constant 0 : i32
    return %c0_i32, %c0_i32_0 : i32, i32
  }
  func.func @transform_8(%arg0: i32, %arg1: i32) -> (i32, i32) {
    %c0_i32 = arith.constant 0 : i32
    %c0_i32_0 = arith.constant 0 : i32
    %c0_i32_1 = arith.constant 0 : i32
    return %c0_i32, %c0_i32_0 : i32, i32
  }
  func.func @transform_9(%arg0: i32, %arg1: i32) -> (i32, i32) {
    %c0_i32 = arith.constant 0 : i32
    %c0_i32_0 = arith.constant 0 : i32
    %c0_i32_1 = arith.constant 0 : i32
    return %c0_i32, %c0_i32_0 : i32, i32
  }
  func.func @transform_10(%arg0: i32, %arg1: i32) -> (i32, i32) {
    %c0_i32 = arith.constant 0 : i32
    %c0_i32_0 = arith.constant 0 : i32
    %c0_i32_1 = arith.constant 0 : i32
    return %c0_i32, %c0_i32_0 : i32, i32
  }
  func.func @transform_11(%arg0: i32, %arg1: i32) -> (i32, i32) {
    %c0_i32 = arith.constant 0 : i32
    %c0_i32_0 = arith.constant 0 : i32
    %c0_i32_1 = arith.constant 0 : i32
    return %c0_i32, %c0_i32_0 : i32, i32
  }
  func.func @transform_12(%arg0: i32, %arg1: i32) -> (i32, i32) {
    %c0_i32 = arith.constant 0 : i32
    %c0_i32_0 = arith.constant 0 : i32
    %c0_i32_1 = arith.constant 0 : i32
    return %c0_i32, %c0_i32_0 : i32, i32
  }
  func.func @transform_13(%arg0: i32, %arg1: i32) -> (i32, i32, i32) {
    %c0_i32 = arith.constant 0 : i32
    %c0_i32_0 = arith.constant 0 : i32
    return %arg0, %arg1, %c0_i32 : i32, i32, i32
  }
}

module attributes {stable_mosaic.version = 11 : i64} {
  func.func @_conv_module_kernel(%arg0: i32, %arg1: i32, %arg2: memref<1x16x16xf32, #tpu.memory_space<vmem>>, %arg3: memref<1x16xf32, #tpu.memory_space<vmem>>, %arg4: memref<1x16xf32, #tpu.memory_space<vmem>>, %arg5: memref<16x32xbf16, #tpu.memory_space<vmem>>, %arg6: memref<16x32xbf16, #tpu.memory_space<vmem>>, %arg7: memref<1x32xf32, #tpu.memory_space<vmem>>, %arg8: memref<1x32xf32, #tpu.memory_space<vmem>>, %arg9: memref<3x32xf32, #tpu.memory_space<vmem>>, %arg10: memref<1x32xf32, #tpu.memory_space<vmem>>, %arg11: memref<1x32xf32, #tpu.memory_space<vmem>>, %arg12: memref<1x32xf32, #tpu.memory_space<vmem>>, %arg13: memref<32x16xbf16, #tpu.memory_space<vmem>>, %arg14: memref<1x16xf32, #tpu.memory_space<vmem>>, %arg15: memref<1x16x16xf32, #tpu.memory_space<vmem>>, %arg16: memref<24x32xf32, #tpu.memory_space<vmem>>) attributes {dimension_semantics = [#tpu.dimension_semantics<parallel>, #tpu.dimension_semantics<arbitrary>], iteration_bounds = array<i64: 2, 2>, scalar_prefetch = 0 : i64, scratch_operands = 1 : i64, tpu.core_type = #tpu.core_type<tc>, window_params = [{transform_indices = @transform_0, window_bounds = array<i64: 1, 16, 16>}, {pipeline_mode = #tpu.pipeline_mode<synchronous>, transform_indices = @transform_1, window_bounds = array<i64: 1, 16>}, {pipeline_mode = #tpu.pipeline_mode<synchronous>, transform_indices = @transform_2, window_bounds = array<i64: 1, 16>}, {pipeline_mode = #tpu.pipeline_mode<synchronous>, transform_indices = @transform_3, window_bounds = array<i64: 16, 32>}, {pipeline_mode = #tpu.pipeline_mode<synchronous>, transform_indices = @transform_4, window_bounds = array<i64: 16, 32>}, {pipeline_mode = #tpu.pipeline_mode<synchronous>, transform_indices = @transform_5, window_bounds = array<i64: 1, 32>}, {pipeline_mode = #tpu.pipeline_mode<synchronous>, transform_indices = @transform_6, window_bounds = array<i64: 1, 32>}, {pipeline_mode = #tpu.pipeline_mode<synchronous>, transform_indices = @transform_7, window_bounds = array<i64: 3, 32>}, {pipeline_mode = #tpu.pipeline_mode<synchronous>, transform_indices = @transform_8, window_bounds = array<i64: 1, 32>}, {pipeline_mode = #tpu.pipeline_mode<synchronous>, transform_indices = @transform_9, window_bounds = array<i64: 1, 32>}, {pipeline_mode = #tpu.pipeline_mode<synchronous>, transform_indices = @transform_10, window_bounds = array<i64: 1, 32>}, {pipeline_mode = #tpu.pipeline_mode<synchronous>, transform_indices = @transform_11, window_bounds = array<i64: 32, 16>}, {pipeline_mode = #tpu.pipeline_mode<synchronous>, transform_indices = @transform_12, window_bounds = array<i64: 1, 16>}, {transform_indices = @transform_13, window_bounds = array<i64: 1, 16, 16>}]} {
    %c0_i32 = arith.constant 0 : i32
    %0 = arith.cmpi eq, %arg1, %c0_i32 : i32
    %1 = arith.extui %0 : i1 to i32
    %c0_i32_0 = arith.constant 0 : i32
    %2 = arith.cmpi ne, %1, %c0_i32_0 : i32
    scf.if %2 {
      %cst_52 = arith.constant 0.000000e+00 : f32
      %109 = vector.broadcast %cst_52 : f32 to vector<8x32xf32>
      %c0_53 = arith.constant 0 : index
      %c0_54 = arith.constant 0 : index
      %110 = vector.load %arg16[%c0_53, %c0_54] : memref<24x32xf32, #tpu.memory_space<vmem>>, vector<8x32xf32>
      tpu.vector_store %arg16[%c0_53, %c0_54], %109 {strides = array<i32>} : memref<24x32xf32, #tpu.memory_space<vmem>>, vector<8x32xf32>,
    } else {
    }
    %c0 = arith.constant 0 : index
    %c0_1 = arith.constant 0 : index
    %c0_2 = arith.constant 0 : index
    %3 = vector.load %arg2[%c0, %c0_1, %c0_2] : memref<1x16x16xf32, #tpu.memory_space<vmem>>, vector<1x16x16xf32>
    %4 = vector.shape_cast %3 : vector<1x16x16xf32> to vector<16x16xf32>
    %cst = arith.constant dense<0.000000e+00> : vector<16xf32>
    %5 = vector.multi_reduction <add>, %4, %cst [1] : vector<16x16xf32> to vector<16xf32>
    %6 = vector.shape_cast %5 : vector<16xf32> to vector<16x1xf32>
    %cst_3 = arith.constant 6.250000e-02 : f32
    %7 = vector.broadcast %cst_3 : f32 to vector<16x1xf32>
    %8 = arith.mulf %6, %7 : vector<16x1xf32>
    %9 = arith.mulf %4, %4 : vector<16x16xf32>
    %cst_4 = arith.constant dense<0.000000e+00> : vector<16xf32>
    %10 = vector.multi_reduction <add>, %9, %cst_4 [1] : vector<16x16xf32> to vector<16xf32>
    %11 = vector.shape_cast %10 : vector<16xf32> to vector<16x1xf32>
    %cst_5 = arith.constant 6.250000e-02 : f32
    %12 = vector.broadcast %cst_5 : f32 to vector<16x1xf32>
    %13 = arith.mulf %11, %12 : vector<16x1xf32>
    %14 = arith.mulf %8, %8 : vector<16x1xf32>
    %15 = arith.subf %13, %14 : vector<16x1xf32>
    %cst_6 = arith.constant 0.000000e+00 : f32
    %16 = vector.broadcast %cst_6 : f32 to vector<16x1xf32>
    %17 = arith.maximumf %15, %16 : vector<16x1xf32>
    %18 = vector.broadcast %8 : vector<16x1xf32> to vector<16x16xf32>
    %19 = arith.subf %4, %18 : vector<16x16xf32>
    %cst_7 = arith.constant 9.99999974E-6 : f32
    %20 = vector.broadcast %cst_7 : f32 to vector<16x1xf32>
    %21 = arith.addf %17, %20 : vector<16x1xf32>
    %22 = math.rsqrt %21 : vector<16x1xf32>
    %23 = vector.broadcast %22 : vector<16x1xf32> to vector<16x16xf32>
    %24 = arith.mulf %19, %23 : vector<16x16xf32>
    %c0_8 = arith.constant 0 : index
    %c0_9 = arith.constant 0 : index
    %25 = vector.load %arg3[%c0_8, %c0_9] : memref<1x16xf32, #tpu.memory_space<vmem>>, vector<1x16xf32>
    %26 = vector.broadcast %25 : vector<1x16xf32> to vector<16x16xf32>
    %27 = arith.mulf %24, %26 : vector<16x16xf32>
    %c0_10 = arith.constant 0 : index
    %c0_11 = arith.constant 0 : index
    %28 = vector.load %arg4[%c0_10, %c0_11] : memref<1x16xf32, #tpu.memory_space<vmem>>, vector<1x16xf32>
    %29 = vector.broadcast %28 : vector<1x16xf32> to vector<16x16xf32>
    %30 = arith.addf %27, %29 : vector<16x16xf32>
    %31 = arith.truncf %30 : vector<16x16xf32> to vector<16x16xbf16>
    %c0_12 = arith.constant 0 : index
    %c0_13 = arith.constant 0 : index
    %32 = vector.load %arg5[%c0_12, %c0_13] : memref<16x32xbf16, #tpu.memory_space<vmem>>, vector<16x32xbf16>
    %cst_14 = arith.constant dense<0.000000e+00> : vector<16x32xf32>
    %33 = tpu.matmul %31, %32, %cst_14 {dimension_numbers = #tpu.dot_dimension_numbers<[1], [0], [0], [1], [0, 0, 1, 1], [], []>} : vector<16x16xbf16>, vector<16x32xbf16>, vector<16x32xf32> -> vector<16x32xf32>
    %c0_15 = arith.constant 0 : index
    %c0_16 = arith.constant 0 : index
    %34 = vector.load %arg7[%c0_15, %c0_16] : memref<1x32xf32, #tpu.memory_space<vmem>>, vector<1x32xf32>
    %35 = vector.broadcast %34 : vector<1x32xf32> to vector<16x32xf32>
    %36 = arith.addf %33, %35 : vector<16x32xf32>
    %c0_17 = arith.constant 0 : index
    %c0_18 = arith.constant 0 : index
    %37 = vector.load %arg6[%c0_17, %c0_18] : memref<16x32xbf16, #tpu.memory_space<vmem>>, vector<16x32xbf16>
    %cst_19 = arith.constant dense<0.000000e+00> : vector<16x32xf32>
    %38 = tpu.matmul %31, %37, %cst_19 {dimension_numbers = #tpu.dot_dimension_numbers<[1], [0], [0], [1], [0, 0, 1, 1], [], []>} : vector<16x16xbf16>, vector<16x32xbf16>, vector<16x32xf32> -> vector<16x32xf32>
    %c0_20 = arith.constant 0 : index
    %c0_21 = arith.constant 0 : index
    %39 = vector.load %arg8[%c0_20, %c0_21] : memref<1x32xf32, #tpu.memory_space<vmem>>, vector<1x32xf32>
    %40 = vector.broadcast %39 : vector<1x32xf32> to vector<16x32xf32>
    %41 = arith.addf %38, %40 : vector<16x32xf32>
    %42 = arith.negf %41 : vector<16x32xf32>
    %43 = math.exp %42 : vector<16x32xf32>
    %cst_22 = arith.constant 1.000000e+00 : f32
    %44 = vector.broadcast %cst_22 : f32 to vector<16x32xf32>
    %45 = arith.addf %44, %43 : vector<16x32xf32>
    %46 = arith.divf %44, %45 : vector<16x32xf32>
    %47 = arith.mulf %36, %46 : vector<16x32xf32>
    %c0_23 = arith.constant 0 : index
    %c0_24 = arith.constant 0 : index
    %48 = vector.load %arg9[%c0_23, %c0_24] : memref<3x32xf32, #tpu.memory_space<vmem>>, vector<3x32xf32>
    %c8 = arith.constant 8 : index
    %c0_25 = arith.constant 0 : index
    %49 = vector.load %arg16[%c8, %c0_25] : memref<24x32xf32, #tpu.memory_space<vmem>>, vector<16x32xf32>
    tpu.vector_store %arg16[%c8, %c0_25], %47 {strides = array<i32>} : memref<24x32xf32, #tpu.memory_space<vmem>>, vector<16x32xf32>,
    %50 = vector.extract_strided_slice %48 {offsets = [2, 0], sizes = [1, 32], strides = [1, 1]} : vector<3x32xf32> to vector<1x32xf32>
    %51 = vector.broadcast %50 : vector<1x32xf32> to vector<16x32xf32>
    %52 = arith.mulf %47, %51 : vector<16x32xf32>
    %c0_26 = arith.constant 0 : index
    %c0_27 = arith.constant 0 : index
    %53 = vector.load %arg10[%c0_26, %c0_27] : memref<1x32xf32, #tpu.memory_space<vmem>>, vector<1x32xf32>
    %54 = vector.broadcast %53 : vector<1x32xf32> to vector<16x32xf32>
    %55 = arith.addf %52, %54 : vector<16x32xf32>
    %c6 = arith.constant 6 : index
    %c0_28 = arith.constant 0 : index
    %56 = vector.load %arg16[%c6, %c0_28] : memref<24x32xf32, #tpu.memory_space<vmem>>, vector<16x32xf32>
    %57 = vector.extract_strided_slice %48 {offsets = [0, 0], sizes = [1, 32], strides = [1, 1]} : vector<3x32xf32> to vector<1x32xf32>
    %58 = vector.broadcast %57 : vector<1x32xf32> to vector<16x32xf32>
    %59 = arith.mulf %56, %58 : vector<16x32xf32>
    %60 = arith.addf %55, %59 : vector<16x32xf32>
    %c7 = arith.constant 7 : index
    %c0_29 = arith.constant 0 : index
    %61 = vector.load %arg16[%c7, %c0_29] : memref<24x32xf32, #tpu.memory_space<vmem>>, vector<16x32xf32>
    %62 = vector.extract_strided_slice %48 {offsets = [1, 0], sizes = [1, 32], strides = [1, 1]} : vector<3x32xf32> to vector<1x32xf32>
    %63 = vector.broadcast %62 : vector<1x32xf32> to vector<16x32xf32>
    %64 = arith.mulf %61, %63 : vector<16x32xf32>
    %65 = arith.addf %60, %64 : vector<16x32xf32>
    %c22 = arith.constant 22 : index
    %c0_30 = arith.constant 0 : index
    %66 = vector.load %arg16[%c22, %c0_30] : memref<24x32xf32, #tpu.memory_space<vmem>>, vector<2x32xf32>
    %c6_31 = arith.constant 6 : index
    %c0_32 = arith.constant 0 : index
    %67 = vector.load %arg16[%c6_31, %c0_32] : memref<24x32xf32, #tpu.memory_space<vmem>>, vector<2x32xf32>
    tpu.vector_store %arg16[%c6_31, %c0_32], %66 {strides = array<i32>} : memref<24x32xf32, #tpu.memory_space<vmem>>, vector<2x32xf32>,
    %cst_33 = arith.constant dense<0.000000e+00> : vector<16xf32>
    %68 = vector.multi_reduction <add>, %65, %cst_33 [1] : vector<16x32xf32> to vector<16xf32>
    %69 = vector.shape_cast %68 : vector<16xf32> to vector<16x1xf32>
    %cst_34 = arith.constant 3.125000e-02 : f32
    %70 = vector.broadcast %cst_34 : f32 to vector<16x1xf32>
    %71 = arith.mulf %69, %70 : vector<16x1xf32>
    %72 = arith.mulf %65, %65 : vector<16x32xf32>
    %cst_35 = arith.constant dense<0.000000e+00> : vector<16xf32>
    %73 = vector.multi_reduction <add>, %72, %cst_35 [1] : vector<16x32xf32> to vector<16xf32>
    %74 = vector.shape_cast %73 : vector<16xf32> to vector<16x1xf32>
    %cst_36 = arith.constant 3.125000e-02 : f32
    %75 = vector.broadcast %cst_36 : f32 to vector<16x1xf32>
    %76 = arith.mulf %74, %75 : vector<16x1xf32>
    %77 = arith.mulf %71, %71 : vector<16x1xf32>
    %78 = arith.subf %76, %77 : vector<16x1xf32>
    %cst_37 = arith.constant 0.000000e+00 : f32
    %79 = vector.broadcast %cst_37 : f32 to vector<16x1xf32>
    %80 = arith.maximumf %78, %79 : vector<16x1xf32>
    %81 = vector.broadcast %71 : vector<16x1xf32> to vector<16x32xf32>
    %82 = arith.subf %65, %81 : vector<16x32xf32>
    %cst_38 = arith.constant 9.99999974E-6 : f32
    %83 = vector.broadcast %cst_38 : f32 to vector<16x1xf32>
    %84 = arith.addf %80, %83 : vector<16x1xf32>
    %85 = math.rsqrt %84 : vector<16x1xf32>
    %86 = vector.broadcast %85 : vector<16x1xf32> to vector<16x32xf32>
    %87 = arith.mulf %82, %86 : vector<16x32xf32>
    %c0_39 = arith.constant 0 : index
    %c0_40 = arith.constant 0 : index
    %88 = vector.load %arg11[%c0_39, %c0_40] : memref<1x32xf32, #tpu.memory_space<vmem>>, vector<1x32xf32>
    %89 = vector.broadcast %88 : vector<1x32xf32> to vector<16x32xf32>
    %90 = arith.mulf %87, %89 : vector<16x32xf32>
    %c0_41 = arith.constant 0 : index
    %c0_42 = arith.constant 0 : index
    %91 = vector.load %arg12[%c0_41, %c0_42] : memref<1x32xf32, #tpu.memory_space<vmem>>, vector<1x32xf32>
    %92 = vector.broadcast %91 : vector<1x32xf32> to vector<16x32xf32>
    %93 = arith.addf %90, %92 : vector<16x32xf32>
    %94 = arith.negf %93 : vector<16x32xf32>
    %95 = math.exp %94 : vector<16x32xf32>
    %cst_43 = arith.constant 1.000000e+00 : f32
    %96 = vector.broadcast %cst_43 : f32 to vector<16x32xf32>
    %97 = arith.addf %96, %95 : vector<16x32xf32>
    %98 = arith.divf %96, %97 : vector<16x32xf32>
    %99 = arith.mulf %93, %98 : vector<16x32xf32>
    %100 = arith.truncf %99 : vector<16x32xf32> to vector<16x32xbf16>
    %c0_44 = arith.constant 0 : index
    %c0_45 = arith.constant 0 : index
    %101 = vector.load %arg13[%c0_44, %c0_45] : memref<32x16xbf16, #tpu.memory_space<vmem>>, vector<32x16xbf16>
    %cst_46 = arith.constant dense<0.000000e+00> : vector<16x16xf32>
    %102 = tpu.matmul %100, %101, %cst_46 {dimension_numbers = #tpu.dot_dimension_numbers<[1], [0], [0], [1], [0, 0, 1, 1], [], []>} : vector<16x32xbf16>, vector<32x16xbf16>, vector<16x16xf32> -> vector<16x16xf32>
    %c0_47 = arith.constant 0 : index
    %c0_48 = arith.constant 0 : index
    %103 = vector.load %arg14[%c0_47, %c0_48] : memref<1x16xf32, #tpu.memory_space<vmem>>, vector<1x16xf32>
    %104 = vector.broadcast %103 : vector<1x16xf32> to vector<16x16xf32>
    %105 = arith.addf %102, %104 : vector<16x16xf32>
    %c0_49 = arith.constant 0 : index
    %c0_50 = arith.constant 0 : index
    %c0_51 = arith.constant 0 : index
    %106 = vector.load %arg15[%c0_49, %c0_50, %c0_51] : memref<1x16x16xf32, #tpu.memory_space<vmem>>, vector<1x16x16xf32>
    %107 = vector.shape_cast %106 : vector<1x16x16xf32> to vector<16x16xf32>
    %108 = vector.shape_cast %105 : vector<16x16xf32> to vector<1x16x16xf32>
    tpu.vector_store %arg15[%c0_49, %c0_50, %c0_51], %108 {strides = array<i32>} : memref<1x16x16xf32, #tpu.memory_space<vmem>>, vector<1x16x16xf32>,
    return
  }
  func.func @transform_0(%arg0: i32, %arg1: i32) -> (i32, i32, i32) {
    %c0_i32 = arith.constant 0 : i32
    %c0_i32_0 = arith.constant 0 : i32
    return %arg0, %arg1, %c0_i32 : i32, i32, i32
  }
  func.func @transform_1(%arg0: i32, %arg1: i32) -> (i32, i32) {
    %c0_i32 = arith.constant 0 : i32
    %c0_i32_0 = arith.constant 0 : i32
    %c0_i32_1 = arith.constant 0 : i32
    return %c0_i32, %c0_i32_0 : i32, i32
  }
  func.func @transform_2(%arg0: i32, %arg1: i32) -> (i32, i32) {
    %c0_i32 = arith.constant 0 : i32
    %c0_i32_0 = arith.constant 0 : i32
    %c0_i32_1 = arith.constant 0 : i32
    return %c0_i32, %c0_i32_0 : i32, i32
  }
  func.func @transform_3(%arg0: i32, %arg1: i32) -> (i32, i32) {
    %c0_i32 = arith.constant 0 : i32
    %c0_i32_0 = arith.constant 0 : i32
    %c0_i32_1 = arith.constant 0 : i32
    return %c0_i32, %c0_i32_0 : i32, i32
  }
  func.func @transform_4(%arg0: i32, %arg1: i32) -> (i32, i32) {
    %c0_i32 = arith.constant 0 : i32
    %c0_i32_0 = arith.constant 0 : i32
    %c0_i32_1 = arith.constant 0 : i32
    return %c0_i32, %c0_i32_0 : i32, i32
  }
  func.func @transform_5(%arg0: i32, %arg1: i32) -> (i32, i32) {
    %c0_i32 = arith.constant 0 : i32
    %c0_i32_0 = arith.constant 0 : i32
    %c0_i32_1 = arith.constant 0 : i32
    return %c0_i32, %c0_i32_0 : i32, i32
  }
  func.func @transform_6(%arg0: i32, %arg1: i32) -> (i32, i32) {
    %c0_i32 = arith.constant 0 : i32
    %c0_i32_0 = arith.constant 0 : i32
    %c0_i32_1 = arith.constant 0 : i32
    return %c0_i32, %c0_i32_0 : i32, i32
  }
  func.func @transform_7(%arg0: i32, %arg1: i32) -> (i32, i32) {
    %c0_i32 = arith.constant 0 : i32
    %c0_i32_0 = arith.constant 0 : i32
    %c0_i32_1 = arith.constant 0 : i32
    return %c0_i32, %c0_i32_0 : i32, i32
  }
  func.func @transform_8(%arg0: i32, %arg1: i32) -> (i32, i32) {
    %c0_i32 = arith.constant 0 : i32
    %c0_i32_0 = arith.constant 0 : i32
    %c0_i32_1 = arith.constant 0 : i32
    return %c0_i32, %c0_i32_0 : i32, i32
  }
  func.func @transform_9(%arg0: i32, %arg1: i32) -> (i32, i32) {
    %c0_i32 = arith.constant 0 : i32
    %c0_i32_0 = arith.constant 0 : i32
    %c0_i32_1 = arith.constant 0 : i32
    return %c0_i32, %c0_i32_0 : i32, i32
  }
  func.func @transform_10(%arg0: i32, %arg1: i32) -> (i32, i32) {
    %c0_i32 = arith.constant 0 : i32
    %c0_i32_0 = arith.constant 0 : i32
    %c0_i32_1 = arith.constant 0 : i32
    return %c0_i32, %c0_i32_0 : i32, i32
  }
  func.func @transform_11(%arg0: i32, %arg1: i32) -> (i32, i32) {
    %c0_i32 = arith.constant 0 : i32
    %c0_i32_0 = arith.constant 0 : i32
    %c0_i32_1 = arith.constant 0 : i32
    return %c0_i32, %c0_i32_0 : i32, i32
  }
  func.func @transform_12(%arg0: i32, %arg1: i32) -> (i32, i32) {
    %c0_i32 = arith.constant 0 : i32
    %c0_i32_0 = arith.constant 0 : i32
    %c0_i32_1 = arith.constant 0 : i32
    return %c0_i32, %c0_i32_0 : i32, i32
  }
  func.func @transform_13(%arg0: i32, %arg1: i32) -> (i32, i32, i32) {
    %c0_i32 = arith.constant 0 : i32
    %c0_i32_0 = arith.constant 0 : i32
    return %arg0, %arg1, %c0_i32 : i32, i32, i32
  }
}

</mosaic_0001>

<llo_original>
// kernel: tpu_custom_call.1
$region0: #{tpu_custom_call.1}
  #allocation0 [shape = 'u32[]', space=smem, size = 0x4, offset = 0x4, fixed_abs, tag = 'smem constant byte address 0x4 - core index']
  #allocation1 [shape = 'u32[72,128]{1,0:T(1,128)}', space=vmem, size = 0x9000, scoped, tag = 'internal scratch']
  #allocation2 [shape = 'f32[24,32]{1,0:T(8,128)}', space=vmem, size = 0x3000, scoped, tag = 'scratch operand']
  %s0 = inlined_call_operand.vmem [shape: f32[2,32,16], index: 0, kind: input, shape index: {}]
  %s1 = inlined_call_operand.vmem [shape: f32[1,16], index: 1, kind: input, shape index: {}]
  %s2 = inlined_call_operand.vmem [shape: f32[1,16], index: 2, kind: input, shape index: {}]
  %s3 = inlined_call_operand.vmem [shape: bf16[16,32], index: 3, kind: input, shape index: {}]
  %s4 = inlined_call_operand.vmem [shape: bf16[16,32], index: 4, kind: input, shape index: {}]
  %s5 = inlined_call_operand.vmem [shape: f32[1,32], index: 5, kind: input, shape index: {}]
  %s6 = inlined_call_operand.vmem [shape: f32[1,32], index: 6, kind: input, shape index: {}]
  %s7 = inlined_call_operand.vmem [shape: f32[3,32], index: 7, kind: input, shape index: {}]
  %s8 = inlined_call_operand.vmem [shape: f32[1,32], index: 8, kind: input, shape index: {}]
  %s9 = inlined_call_operand.vmem [shape: f32[1,32], index: 9, kind: input, shape index: {}]
  %s10 = inlined_call_operand.vmem [shape: f32[1,32], index: 10, kind: input, shape index: {}]
  %s11 = inlined_call_operand.vmem [shape: bf16[32,16], index: 11, kind: input, shape index: {}]
  %s12 = inlined_call_operand.vmem [shape: f32[1,16], index: 12, kind: input, shape index: {}]
  %s13 = inlined_call_operand.vmem [shape: f32[2,32,16], index: 13, kind: output, shape index: {}]
  %s14 = sld [smem:[#allocation0]]
  $region89: #{tpu_custom_call.1} parent=0
    _
  %s16 = ssub.s32 1, %s14
  %s17 = scalar_select 0, %s16, %s14
  loop: start=0, step=1, limit=6
  $region2: #{tpu_custom_call.1} parent=0 // loop_pre_header
    _
  $region3: #{tpu_custom_call.1} parent=0 // loop_header
    %s19 = sphi 0, %s23
    %p20 = scmp.ge.s32.totalorder %s19, 6
    %s26 = sphi 0, %s38
    %s27 = sphi 0, %s34
    %s28 = sphi 0, %s26
    %s29 = sphi 0, %s27
    %s30 = sphi 0, %s28
    %s31 = sphi 0, %s29
    %s43 = sphi 0, %s45
    %s46 = sphi 0, %s43
    %s47 = sphi 0, %s46
    %s63 = sphi 0, %s47
    %s67 = sphi 0, %s67
    %s69 = sphi 0, %s67
    %s70 = sphi 0, %s69
    %s84 = sphi 0, %s70
    %s88 = sphi 0, %s88
    %s90 = sphi 0, %s88
    %s91 = sphi 0, %s90
    %s105 = sphi 0, %s91
    %s109 = sphi 0, %s109
    %s111 = sphi 0, %s109
    %s112 = sphi 0, %s111
    %s126 = sphi 0, %s112
    %s130 = sphi 0, %s130
    %s132 = sphi 0, %s130
    %s133 = sphi 0, %s132
    %s147 = sphi 0, %s133
    %s151 = sphi 0, %s151
    %s153 = sphi 0, %s151
    %s154 = sphi 0, %s153
    %s168 = sphi 0, %s154
    %s172 = sphi 0, %s172
    %s174 = sphi 0, %s172
    %s175 = sphi 0, %s174
    %s189 = sphi 0, %s175
    %s193 = sphi 0, %s193
    %s195 = sphi 0, %s193
    %s196 = sphi 0, %s195
    %s210 = sphi 0, %s196
    %s214 = sphi 0, %s214
    %s216 = sphi 0, %s214
    %s217 = sphi 0, %s216
    %s231 = sphi 0, %s217
    %s235 = sphi 0, %s235
    %s237 = sphi 0, %s235
    %s238 = sphi 0, %s237
    %s252 = sphi 0, %s238
    %s256 = sphi 0, %s256
    %s258 = sphi 0, %s256
    %s259 = sphi 0, %s258
    %s273 = sphi 0, %s259
    %s277 = sphi 0, %s277
    %s279 = sphi 0, %s277
    %s280 = sphi 0, %s279
    %s294 = sphi 0, %s280
    %s298 = sphi 0, %s298
    %s300 = sphi 0, %s298
    %s301 = sphi 0, %s300
    %s315 = sphi 0, %s301
    %s323 = sphi 0, %s325
    %s326 = sphi 0, %s323
    %s327 = sphi 0, %s326
    %s343 = sphi 0, %s327
  $region4: #{tpu_custom_call.1} parent=0 // loop_header_branch
    %22 = sbr.rel (%p20) target = $region8
  $region5: #{tpu_custom_call.1} parent=0 // loop_body
    %s24 = ssub.s32 %s19, 1
    %s25 = ssub.s32 %s19, 2
    %s32 = sadd.s32 1, %s27
    %p33 = scmp.ge.s32.totalorder %s32, 2
    %s34 = scalar_select %p33, 0, %s32
    %s35 = sadd.s32 1, %s26
    %s36 = scalar_select %p33, %s35, %s26
    %p37 = scmp.ge.s32.totalorder %s36, 2
    %s38 = scalar_select %p37, 0, %s36
    %s39 = ssub.s32 %s26, %s38
    %s40 = ssub.s32 %s27, %s34
    %s41 = sor.u32 %s39, %s40
    %p42 = scmp.eq.s32.totalorder %s41, 0
    %s44 = sadd.s32 %s43, 1
    %s45 = scalar_select %p42, %s43, %s44
    %p48 = pneg %p42
    %p49 = scmp.eq.s32.totalorder %s19, 3
    %p50 = por %p48, %p49
    %p51 = scmp.ne.s32.totalorder %s43, %s46
    %p52 = scmp.eq.s32.totalorder %s19, 0
    %p53 = por %p51, %p52
    %p54 = scmp.ne.s32.totalorder %s43, %s46
    %p55 = scmp.eq.s32.totalorder %s24, 3
    %p56 = por %p54, %p55
    %p57 = scmp.ne.s32.totalorder %s46, %s47
    %p58 = scmp.eq.s32.totalorder %s24, 0
    %p59 = por %p57, %p58
    %p60 = scmp.ne.s32.totalorder %s46, %s47
    %p61 = scmp.eq.s32.totalorder %s25, 3
    %p62 = por %p60, %p61
    %p64 = scmp.ne.s32.totalorder %s47, %s63
    %p65 = scmp.eq.s32.totalorder %s25, 0
    %p66 = por %p64, %p65
    %s68 = sadd.s32 %s67, 1
    %p71 = scmp.eq.s32.totalorder %s19, 3
    %p72 = scmp.ne.s32.totalorder %s67, %s69
    %p73 = scmp.eq.s32.totalorder %s19, 0
    %p74 = por %p72, %p73
    %p75 = scmp.ne.s32.totalorder %s67, %s69
    %p76 = scmp.eq.s32.totalorder %s24, 3
    %p77 = por %p75, %p76
    %p78 = scmp.ne.s32.totalorder %s69, %s70
    %p79 = scmp.eq.s32.totalorder %s24, 0
    %p80 = por %p78, %p79
    %p81 = scmp.ne.s32.totalorder %s69, %s70
    %p82 = scmp.eq.s32.totalorder %s25, 3
    %p83 = por %p81, %p82
    %p85 = scmp.ne.s32.totalorder %s70, %s84
    %p86 = scmp.eq.s32.totalorder %s25, 0
    %p87 = por %p85, %p86
    %s89 = sadd.s32 %s88, 1
    %p92 = scmp.eq.s32.totalorder %s19, 3
    %p93 = scmp.ne.s32.totalorder %s88, %s90
    %p94 = scmp.eq.s32.totalorder %s19, 0
    %p95 = por %p93, %p94
    %p96 = scmp.ne.s32.totalorder %s88, %s90
    %p97 = scmp.eq.s32.totalorder %s24, 3
    %p98 = por %p96, %p97
    %p99 = scmp.ne.s32.totalorder %s90, %s91
    %p100 = scmp.eq.s32.totalorder %s24, 0
    %p101 = por %p99, %p100
    %p102 = scmp.ne.s32.totalorder %s90, %s91
    %p103 = scmp.eq.s32.totalorder %s25, 3
    %p104 = por %p102, %p103
    %p106 = scmp.ne.s32.totalorder %s91, %s105
    %p107 = scmp.eq.s32.totalorder %s25, 0
    %p108 = por %p106, %p107
    %s110 = sadd.s32 %s109, 1
    %p113 = scmp.eq.s32.totalorder %s19, 3
    %p114 = scmp.ne.s32.totalorder %s109, %s111
    %p115 = scmp.eq.s32.totalorder %s19, 0
    %p116 = por %p114, %p115
    %p117 = scmp.ne.s32.totalorder %s109, %s111
    %p118 = scmp.eq.s32.totalorder %s24, 3
    %p119 = por %p117, %p118
    %p120 = scmp.ne.s32.totalorder %s111, %s112
    %p121 = scmp.eq.s32.totalorder %s24, 0
    %p122 = por %p120, %p121
    %p123 = scmp.ne.s32.totalorder %s111, %s112
    %p124 = scmp.eq.s32.totalorder %s25, 3
    %p125 = por %p123, %p124
    %p127 = scmp.ne.s32.totalorder %s112, %s126
    %p128 = scmp.eq.s32.totalorder %s25, 0
    %p129 = por %p127, %p128
    %s131 = sadd.s32 %s130, 1
    %p134 = scmp.eq.s32.totalorder %s19, 3
    %p135 = scmp.ne.s32.totalorder %s130, %s132
    %p136 = scmp.eq.s32.totalorder %s19, 0
    %p137 = por %p135, %p136
    %p138 = scmp.ne.s32.totalorder %s130, %s132
    %p139 = scmp.eq.s32.totalorder %s24, 3
    %p140 = por %p138, %p139
    %p141 = scmp.ne.s32.totalorder %s132, %s133
    %p142 = scmp.eq.s32.totalorder %s24, 0
    %p143 = por %p141, %p142
    %p144 = scmp.ne.s32.totalorder %s132, %s133
    %p145 = scmp.eq.s32.totalorder %s25, 3
    %p146 = por %p144, %p145
    %p148 = scmp.ne.s32.totalorder %s133, %s147
    %p149 = scmp.eq.s32.totalorder %s25, 0
    %p150 = por %p148, %p149
    %s152 = sadd.s32 %s151, 1
    %p155 = scmp.eq.s32.totalorder %s19, 3
    %p156 = scmp.ne.s32.totalorder %s151, %s153
    %p157 = scmp.eq.s32.totalorder %s19, 0
    %p158 = por %p156, %p157
    %p159 = scmp.ne.s32.totalorder %s151, %s153
    %p160 = scmp.eq.s32.totalorder %s24, 3
    %p161 = por %p159, %p160
    %p162 = scmp.ne.s32.totalorder %s153, %s154
    %p163 = scmp.eq.s32.totalorder %s24, 0
    %p164 = por %p162, %p163
    %p165 = scmp.ne.s32.totalorder %s153, %s154
    %p166 = scmp.eq.s32.totalorder %s25, 3
    %p167 = por %p165, %p166
    %p169 = scmp.ne.s32.totalorder %s154, %s168
    %p170 = scmp.eq.s32.totalorder %s25, 0
    %p171 = por %p169, %p170
    %s173 = sadd.s32 %s172, 1
    %p176 = scmp.eq.s32.totalorder %s19, 3
    %p177 = scmp.ne.s32.totalorder %s172, %s174
    %p178 = scmp.eq.s32.totalorder %s19, 0
    %p179 = por %p177, %p178
    %p180 = scmp.ne.s32.totalorder %s172, %s174
    %p181 = scmp.eq.s32.totalorder %s24, 3
    %p182 = por %p180, %p181
    %p183 = scmp.ne.s32.totalorder %s174, %s175
    %p184 = scmp.eq.s32.totalorder %s24, 0
    %p185 = por %p183, %p184
    %p186 = scmp.ne.s32.totalorder %s174, %s175
    %p187 = scmp.eq.s32.totalorder %s25, 3
    %p188 = por %p186, %p187
    %p190 = scmp.ne.s32.totalorder %s175, %s189
    %p191 = scmp.eq.s32.totalorder %s25, 0
    %p192 = por %p190, %p191
    %s194 = sadd.s32 %s193, 1
    %p197 = scmp.eq.s32.totalorder %s19, 3
    %p198 = scmp.ne.s32.totalorder %s193, %s195
    %p199 = scmp.eq.s32.totalorder %s19, 0
    %p200 = por %p198, %p199
    %p201 = scmp.ne.s32.totalorder %s193, %s195
    %p202 = scmp.eq.s32.totalorder %s24, 3
    %p203 = por %p201, %p202
    %p204 = scmp.ne.s32.totalorder %s195, %s196
    %p205 = scmp.eq.s32.totalorder %s24, 0
    %p206 = por %p204, %p205
    %p207 = scmp.ne.s32.totalorder %s195, %s196
    %p208 = scmp.eq.s32.totalorder %s25, 3
    %p209 = por %p207, %p208
    %p211 = scmp.ne.s32.totalorder %s196, %s210
    %p212 = scmp.eq.s32.totalorder %s25, 0
    %p213 = por %p211, %p212
    %s215 = sadd.s32 %s214, 1
    %p218 = scmp.eq.s32.totalorder %s19, 3
    %p219 = scmp.ne.s32.totalorder %s214, %s216
    %p220 = scmp.eq.s32.totalorder %s19, 0
    %p221 = por %p219, %p220
    %p222 = scmp.ne.s32.totalorder %s214, %s216
    %p223 = scmp.eq.s32.totalorder %s24, 3
    %p224 = por %p222, %p223
    %p225 = scmp.ne.s32.totalorder %s216, %s217
    %p226 = scmp.eq.s32.totalorder %s24, 0
    %p227 = por %p225, %p226
    %p228 = scmp.ne.s32.totalorder %s216, %s217
    %p229 = scmp.eq.s32.totalorder %s25, 3
    %p230 = por %p228, %p229
    %p232 = scmp.ne.s32.totalorder %s217, %s231
    %p233 = scmp.eq.s32.totalorder %s25, 0
    %p234 = por %p232, %p233
    %s236 = sadd.s32 %s235, 1
    %p239 = scmp.eq.s32.totalorder %s19, 3
    %p240 = scmp.ne.s32.totalorder %s235, %s237
    %p241 = scmp.eq.s32.totalorder %s19, 0
    %p242 = por %p240, %p241
    %p243 = scmp.ne.s32.totalorder %s235, %s237
    %p244 = scmp.eq.s32.totalorder %s24, 3
    %p245 = por %p243, %p244
    %p246 = scmp.ne.s32.totalorder %s237, %s238
    %p247 = scmp.eq.s32.totalorder %s24, 0
    %p248 = por %p246, %p247
    %p249 = scmp.ne.s32.totalorder %s237, %s238
    %p250 = scmp.eq.s32.totalorder %s25, 3
    %p251 = por %p249, %p250
    %p253 = scmp.ne.s32.totalorder %s238, %s252
    %p254 = scmp.eq.s32.totalorder %s25, 0
    %p255 = por %p253, %p254
    %s257 = sadd.s32 %s256, 1
    %p260 = scmp.eq.s32.totalorder %s19, 3
    %p261 = scmp.ne.s32.totalorder %s256, %s258
    %p262 = scmp.eq.s32.totalorder %s19, 0
    %p263 = por %p261, %p262
    %p264 = scmp.ne.s32.totalorder %s256, %s258
    %p265 = scmp.eq.s32.totalorder %s24, 3
    %p266 = por %p264, %p265
    %p267 = scmp.ne.s32.totalorder %s258, %s259
    %p268 = scmp.eq.s32.totalorder %s24, 0
    %p269 = por %p267, %p268
    %p270 = scmp.ne.s32.totalorder %s258, %s259
    %p271 = scmp.eq.s32.totalorder %s25, 3
    %p272 = por %p270, %p271
    %p274 = scmp.ne.s32.totalorder %s259, %s273
    %p275 = scmp.eq.s32.totalorder %s25, 0
    %p276 = por %p274, %p275
    %s278 = sadd.s32 %s277, 1
    %p281 = scmp.eq.s32.totalorder %s19, 3
    %p282 = scmp.ne.s32.totalorder %s277, %s279
    %p283 = scmp.eq.s32.totalorder %s19, 0
    %p284 = por %p282, %p283
    %p285 = scmp.ne.s32.totalorder %s277, %s279
    %p286 = scmp.eq.s32.totalorder %s24, 3
    %p287 = por %p285, %p286
    %p288 = scmp.ne.s32.totalorder %s279, %s280
    %p289 = scmp.eq.s32.totalorder %s24, 0
    %p290 = por %p288, %p289
    %p291 = scmp.ne.s32.totalorder %s279, %s280
    %p292 = scmp.eq.s32.totalorder %s25, 3
    %p293 = por %p291, %p292
    %p295 = scmp.ne.s32.totalorder %s280, %s294
    %p296 = scmp.eq.s32.totalorder %s25, 0
    %p297 = por %p295, %p296
    %s299 = sadd.s32 %s298, 1
    %p302 = scmp.eq.s32.totalorder %s19, 3
    %p303 = scmp.ne.s32.totalorder %s298, %s300
    %p304 = scmp.eq.s32.totalorder %s19, 0
    %p305 = por %p303, %p304
    %p306 = scmp.ne.s32.totalorder %s298, %s300
    %p307 = scmp.eq.s32.totalorder %s24, 3
    %p308 = por %p306, %p307
    %p309 = scmp.ne.s32.totalorder %s300, %s301
    %p310 = scmp.eq.s32.totalorder %s24, 0
    %p311 = por %p309, %p310
    %p312 = scmp.ne.s32.totalorder %s300, %s301
    %p313 = scmp.eq.s32.totalorder %s25, 3
    %p314 = por %p312, %p313
    %p316 = scmp.ne.s32.totalorder %s301, %s315
    %p317 = scmp.eq.s32.totalorder %s25, 0
    %p318 = por %p316, %p317
    %s319 = ssub.s32 %s26, %s38
    %s320 = ssub.s32 %s27, %s34
    %s321 = sor.u32 %s319, %s320
    %p322 = scmp.eq.s32.totalorder %s321, 0
    %s324 = sadd.s32 %s323, 1
    %s325 = scalar_select %p322, %s323, %s324
    %p328 = pneg %p322
    %p329 = scmp.eq.s32.totalorder %s19, 3
    %p330 = por %p328, %p329
    %p331 = scmp.ne.s32.totalorder %s323, %s326
    %p332 = scmp.eq.s32.totalorder %s19, 0
    %p333 = por %p331, %p332
    %p334 = scmp.ne.s32.totalorder %s323, %s326
    %p335 = scmp.eq.s32.totalorder %s24, 3
    %p336 = por %p334, %p335
    %p337 = scmp.ne.s32.totalorder %s326, %s327
    %p338 = scmp.eq.s32.totalorder %s24, 0
    %p339 = por %p337, %p338
    %p340 = scmp.ne.s32.totalorder %s326, %s327
    %p341 = scmp.eq.s32.totalorder %s25, 3
    %p342 = por %p340, %p341
    %p344 = scmp.ne.s32.totalorder %s327, %s343
    %p345 = scmp.eq.s32.totalorder %s25, 0
    %p346 = por %p344, %p345
    %p347 = scmp.le.s32.totalorder 1, %s19
    %p348 = scmp.lt.s32.totalorder %s19, 5
    %p349 = pnand %p347, %p348
    %p350 = pneg %p349
    // Predicated region
    $region9: #{tpu_custom_call.1} parent=5 // pred_check
      _
    $region10: #{tpu_custom_call.1} parent=5 // pred_check_branch
      %352 = sbr.rel (%p349) target = $region12
    $region11: #{tpu_custom_call.1} parent=5 // pred_region
      %s353 = ssub.s32 %s19, 1
      // Predicated region
      $region13: #{tpu_custom_call.1} parent=11 // pred_check
        %p354 = pneg %p80
      $region14: #{tpu_custom_call.1} parent=11 // pred_check_branch
        %356 = sbr.rel (%p354) target = $region16
      $region15: #{tpu_custom_call.1} parent=11 // pred_region
        _
      $region16: #{tpu_custom_call.1} parent=11 // pred_fallthru
        _
      // Predicated region
      $region17: #{tpu_custom_call.1} parent=11 // pred_check
        %p357 = pneg %p101
      $region18: #{tpu_custom_call.1} parent=11 // pred_check_branch
        %359 = sbr.rel (%p357) target = $region20
      $region19: #{tpu_custom_call.1} parent=11 // pred_region
        _
      $region20: #{tpu_custom_call.1} parent=11 // pred_fallthru
        _
      // Predicated region
      $region21: #{tpu_custom_call.1} parent=11 // pred_check
        %p360 = pneg %p122
      $region22: #{tpu_custom_call.1} parent=11 // pred_check_branch
        %362 = sbr.rel (%p360) target = $region24
      $region23: #{tpu_custom_call.1} parent=11 // pred_region
        _
      $region24: #{tpu_custom_call.1} parent=11 // pred_fallthru
        _
      // Predicated region
      $region25: #{tpu_custom_call.1} parent=11 // pred_check
        %p363 = pneg %p143
      $region26: #{tpu_custom_call.1} parent=11 // pred_check_branch
        %365 = sbr.rel (%p363) target = $region28
      $region27: #{tpu_custom_call.1} parent=11 // pred_region
        _
      $region28: #{tpu_custom_call.1} parent=11 // pred_fallthru
        _
      // Predicated region
      $region29: #{tpu_custom_call.1} parent=11 // pred_check
        %p366 = pneg %p164
      $region30: #{tpu_custom_call.1} parent=11 // pred_check_branch
        %368 = sbr.rel (%p366) target = $region32
      $region31: #{tpu_custom_call.1} parent=11 // pred_region
        _
      $region32: #{tpu_custom_call.1} parent=11 // pred_fallthru
        _
      // Predicated region
      $region33: #{tpu_custom_call.1} parent=11 // pred_check
        %p369 = pneg %p185
      $region34: #{tpu_custom_call.1} parent=11 // pred_check_branch
        %371 = sbr.rel (%p369) target = $region36
      $region35: #{tpu_custom_call.1} parent=11 // pred_region
        _
      $region36: #{tpu_custom_call.1} parent=11 // pred_fallthru
        _
      // Predicated region
      $region37: #{tpu_custom_call.1} parent=11 // pred_check
        %p372 = pneg %p206
      $region38: #{tpu_custom_call.1} parent=11 // pred_check_branch
        %374 = sbr.rel (%p372) target = $region40
      $region39: #{tpu_custom_call.1} parent=11 // pred_region
        _
      $region40: #{tpu_custom_call.1} parent=11 // pred_fallthru
        _
      // Predicated region
      $region41: #{tpu_custom_call.1} parent=11 // pred_check
        %p375 = pneg %p227
      $region42: #{tpu_custom_call.1} parent=11 // pred_check_branch
        %377 = sbr.rel (%p375) target = $region44
      $region43: #{tpu_custom_call.1} parent=11 // pred_region
        _
      $region44: #{tpu_custom_call.1} parent=11 // pred_fallthru
        _
      // Predicated region
      $region45: #{tpu_custom_call.1} parent=11 // pred_check
        %p378 = pneg %p248
      $region46: #{tpu_custom_call.1} parent=11 // pred_check_branch
        %380 = sbr.rel (%p378) target = $region48
      $region47: #{tpu_custom_call.1} parent=11 // pred_region
        _
      $region48: #{tpu_custom_call.1} parent=11 // pred_fallthru
        _
      // Predicated region
      $region49: #{tpu_custom_call.1} parent=11 // pred_check
        %p381 = pneg %p269
      $region50: #{tpu_custom_call.1} parent=11 // pred_check_branch
        %383 = sbr.rel (%p381) target = $region52
      $region51: #{tpu_custom_call.1} parent=11 // pred_region
        _
      $region52: #{tpu_custom_call.1} parent=11 // pred_fallthru
        _
      // Predicated region
      $region53: #{tpu_custom_call.1} parent=11 // pred_check
        %p384 = pneg %p290
      $region54: #{tpu_custom_call.1} parent=11 // pred_check_branch
        %386 = sbr.rel (%p384) target = $region56
      $region55: #{tpu_custom_call.1} parent=11 // pred_region
        _
      $region56: #{tpu_custom_call.1} parent=11 // pred_fallthru
        _
      // Predicated region
      $region57: #{tpu_custom_call.1} parent=11 // pred_check
        %p387 = pneg %p311
      $region58: #{tpu_custom_call.1} parent=11 // pred_check_branch
        %389 = sbr.rel (%p387) target = $region60
      $region59: #{tpu_custom_call.1} parent=11 // pred_region
        _
      $region60: #{tpu_custom_call.1} parent=11 // pred_fallthru
        _
    $region12: #{tpu_custom_call.1} parent=5 // pred_fallthru
      _
    %p390 = scmp.lt.s32.totalorder %s19, 4
    // Predicated region
    $region61: #{tpu_custom_call.1} parent=5 // pred_check
      %p391 = pneg %p390
    $region62: #{tpu_custom_call.1} parent=5 // pred_check_branch
      %393 = sbr.rel (%p391) target = $region64
    $region63: #{tpu_custom_call.1} parent=5 // pred_region
      // Predicated region
      $region65: #{tpu_custom_call.1} parent=63 // pred_check
        %p394 = pneg %p53
      $region66: #{tpu_custom_call.1} parent=63 // pred_check_branch
        %396 = sbr.rel (%p394) target = $region68
      $region67: #{tpu_custom_call.1} parent=63 // pred_region
        %s397 = smul.u32 2, %s27
        %p398 = scmp.lt.s32.totalorder %s26, 1
        %s399 = scalar_select %p398, %s26, 1
        %p400 = scmp.lt.s32.totalorder %s397, 3
        %s401 = scalar_select %p400, %s397, 3
        %s402 = smul.addr %s399, 4
        %s403 = sadd.s32 %s401, %s402
        %s404 = smul.addr %s403, 8
        %s405 = scalar_lea.vmem %s0, %s404
        %s406 = smul.u32 2, %s27
      $region68: #{tpu_custom_call.1} parent=63 // pred_fallthru
        _
    $region64: #{tpu_custom_call.1} parent=5 // pred_fallthru
      _
    %p407 = scmp.le.s32.totalorder 1, %s19
    %p408 = scmp.lt.s32.totalorder %s19, 5
    %p409 = pnand %p407, %p408
    %p410 = pneg %p409
    // Predicated region
    $region69: #{tpu_custom_call.1} parent=5 // pred_check
      _
    $region70: #{tpu_custom_call.1} parent=5 // pred_check_branch
      %412 = sbr.rel (%p409) target = $region72
    $region71: #{tpu_custom_call.1} parent=5 // pred_region
      %s413 = ssub.s32 %s19, 1
      %s414 = smul.u32 2, %s29
      %p415 = scmp.lt.s32.totalorder %s28, 1
      %s416 = scalar_select %p415, %s28, 1
      %p417 = scmp.lt.s32.totalorder %s414, 3
      %s418 = scalar_select %p417, %s414, 3
      %s419 = smul.addr %s416, 4
      %s420 = sadd.s32 %s418, %s419
      %s421 = smul.addr %s420, 8
      %s422 = scalar_lea.vmem %s0, %s421
      %p423 = pneg %p59
      %p424 = pneg %p56
      %p425 = pneg %p80
      %p426 = pneg %p77
      %p427 = pneg %p101
      %p428 = pneg %p98
      %p429 = pneg %p122
      %p430 = pneg %p119
      %p431 = pneg %p143
      %p432 = pneg %p140
      %p433 = pneg %p164
      %p434 = pneg %p161
      %p435 = pneg %p185
      %p436 = pneg %p182
      %p437 = pneg %p206
      %p438 = pneg %p203
      %p439 = pneg %p227
      %p440 = pneg %p224
      %p441 = pneg %p248
      %p442 = pneg %p245
      %p443 = pneg %p269
      %p444 = pneg %p266
      %p445 = pneg %p290
      %p446 = pneg %p287
      %p447 = pneg %p311
      %p448 = pneg %p308
      %p449 = pneg %p339
      %p450 = pneg %p336
      %s451 = smul.u32 2, %s29
      %p452 = scmp.lt.s32.totalorder %s28, 1
      %s453 = scalar_select %p452, %s28, 1
      %p454 = scmp.lt.s32.totalorder %s451, 3
      %s455 = scalar_select %p454, %s451, 3
      %s456 = smul.addr %s453, 4
      %s457 = sadd.s32 %s455, %s456
      %s458 = smul.addr %s457, 8
      %s459 = scalar_lea.vmem %s13, %s458
      %s460 = smul.u32 2, %s29
      %p461 = scmp.lt.s32.totalorder %s28, 1
      %s462 = scalar_select %p461, %s28, 1
      %p463 = scmp.lt.s32.totalorder %s460, 3
      %s464 = scalar_select %p463, %s460, 3
      %s465 = smul.addr %s462, 4
      %s466 = sadd.s32 %s464, %s465
      %s467 = smul.addr %s466, 8
      %s468 = scalar_lea.vmem %s0, %s467
      %s469 = smul.u32 2, %s29
      %s470 = smul.u32 2, %s29
      %p471 = scmp.lt.s32.totalorder %s28, 1
      %s472 = scalar_select %p471, %s28, 1
      %p473 = scmp.lt.s32.totalorder %s470, 3
      %s474 = scalar_select %p473, %s470, 3
      %s475 = smul.addr %s472, 4
      %s476 = sadd.s32 %s474, %s475
      %s477 = smul.addr %s476, 8
      %s478 = scalar_lea.vmem %s13, %s477
      %s479 = smul.u32 2, %s29
      %p481 = scmp.eq.s32.totalorder %s29, 0
      // Predicated region
      $region73: #{tpu_custom_call.1} parent=71 // pred_check
        %p482 = pneg %p481
      $region74: #{tpu_custom_call.1} parent=71 // pred_check_branch
        %484 = sbr.rel (%p482) target = $region76
      $region75: #{tpu_custom_call.1} parent=71 // pred_region
        %vm485 = vcmask 261120
        %486 = vst.msk [vmem:[#allocation2] sm:$0xff] %vm485, 0.0
      $region76: #{tpu_custom_call.1} parent=71 // pred_fallthru
        _
      %v487 = vld [vmem:[%s468] sm:$0xff]
      %v488 = vld [vmem:[%s468 + $0x8] sm:$0xff]
      %vm489 = vcmask 130048
      %v490 = vsel %vm489, %v487, 0.0
      %491 = vadd.xlane.f32.xlu0 %v490
      %v492 = vpop.xlane.xlu0 %491
      %v493 = vsel %vm489, %v488, 0.0
      %494 = vadd.xlane.f32.xlu0 %v493
      %v495 = vpop.xlane.xlu0 %494
      %v496 = vmul.f32 %v492, 0.0625
      %v497 = vmul.f32 %v495, 0.0625
      %v498 = vmul.f32 %v487, %v487
      %v499 = vmul.f32 %v488, %v488
      %v500 = vsel %vm489, %v498, 0.0
      %501 = vadd.xlane.f32.xlu0 %v500
      %v502 = vpop.xlane.xlu0 %501
      %v503 = vsel %vm489, %v499, 0.0
      %504 = vadd.xlane.f32.xlu0 %v503
      %v505 = vpop.xlane.xlu0 %504
      %v506 = vmul.f32 %v502, 0.0625
      %v507 = vmul.f32 %v505, 0.0625
      %v508 = vmul.f32 %v496, %v496
      %v509 = vmul.f32 %v497, %v497
      %v510 = vsub.f32 %v506, %v508
      %v511 = vsub.f32 %v507, %v509
      %v512 = vmax.f32 %v510, 0.0
      %v513 = vmax.f32 %v511, 0.0
      %v514 = vsub.f32 %v487, %v496
      %v515 = vsub.f32 %v488, %v497
      %v516 = vadd.f32 %v512, 1e-05
      %v517 = vadd.f32 %v513, 1e-05
      %v518 = vrsqrt.pop %v516
      %v519 = vmul.f32 %v518, %v516
      %v520 = vmul.f32 %v519, %v518
      %v521 = vmul.f32 0.5, %v520
      %v522 = vsub.f32 1.5, %v521
      %v523 = vmul.f32 %v518, %v522
      %vm524 = vweird.f32 %v516
      %vm525 = vweird.f32 %v518
      %vm526 = vmor %vm524, %vm525
      %v527 = vsel %vm526, %v518, %v523
      %v528 = vrsqrt.pop %v517
      %v529 = vmul.f32 %v528, %v517
      %v530 = vmul.f32 %v529, %v528
      %v531 = vmul.f32 0.5, %v530
      %v532 = vsub.f32 1.5, %v531
      %v533 = vmul.f32 %v528, %v532
      %vm534 = vweird.f32 %v517
      %vm535 = vweird.f32 %v528
      %vm536 = vmor %vm534, %vm535
      %v537 = vsel %vm536, %v528, %v533
      %v538 = vmul.f32 %v514, %v527
      %v539 = vmul.f32 %v515, %v537
      %v540 = vld [vmem:[%s1] sm:$0x1]
      %v542 = vperm.slane %v540, 0
      %v544 = vmul.f32 %v538, %v542
      %v545 = vmul.f32 %v539, %v542
      %v546 = vld [vmem:[%s2] sm:$0x1]
      %v548 = vperm.slane %v546, 0
      %v550 = vadd.f32 %v544, %v548
      %v551 = vadd.f32 %v545, %v548
      %v552 = vpack.c.bf16 %v551, %v550
      %v553 = vld [vmem:[%s3] sm:$0xf]
      %v554 = vld [vmem:[%s3 + $0x4] sm:$0xf]
      %v555 = vld [vmem:[%s5] sm:$0x1]
      %v557 = vperm.slane %v555, 0
      %v561 = vunpack.c.l.b16 %v553
      %v562 = vunpack.c.l.b16 %v554
      %v563 = vpack.c.b16 %v562, %v561
      %v566 = vsel %vm489, %v552, 0
      %568 = vmatpush.bf16.msra.mxu0 0
      %569 = vmatpush.bf16.msra.mxu0 0
      %570 = vmatpush.bf16.msra.mxu0 0
      %571 = vmatpush.bf16.msra.mxu0 0
      %572 = vmatpush.bf16.msra.mxu0 0
      %573 = vmatpush.bf16.msra.mxu0 0
      %574 = vmatpush.bf16.msra.mxu0 0
      %575 = vmatpush.bf16.msra.mxu0 %v563
      %576 = vmatmul.bf16.gmra.mxu0 %v566
      %v577 = vpop.f32.mrf.mxu0
      %v578 = vadd.f32 %v557, %v577
      %v579 = vpop.f32.mrf.mxu0
      %v580 = vadd.f32 %v557, %v579
      %581 = vdwg.mxu0
      %v582 = vld [vmem:[%s4] sm:$0xf]
      %v583 = vld [vmem:[%s4 + $0x4] sm:$0xf]
      %v584 = vld [vmem:[%s6] sm:$0x1]
      %v586 = vperm.slane %v584, 0
      %v590 = vunpack.c.l.b16 %v582
      %v591 = vunpack.c.l.b16 %v583
      %v592 = vpack.c.b16 %v591, %v590
      %594 = vmatpush.bf16.msra.mxu0 0
      %595 = vmatpush.bf16.msra.mxu0 0
      %596 = vmatpush.bf16.msra.mxu0 0
      %597 = vmatpush.bf16.msra.mxu0 0
      %598 = vmatpush.bf16.msra.mxu0 0
      %599 = vmatpush.bf16.msra.mxu0 0
      %600 = vmatpush.bf16.msra.mxu0 0
      %601 = vmatpush.bf16.msra.mxu0 %v592
      %602 = vmatmul.bf16.gmra.mxu0 %v566
      %v603 = vpop.f32.mrf.mxu0
      %v604 = vadd.f32 %v586, %v603
      %v605 = vpop.f32.mrf.mxu0
      %v606 = vadd.f32 %v586, %v605
      %607 = vdwg.mxu0
      %v608 = vxor.u32 %v604, 2147483648
      %v609 = vxor.u32 %v606, 2147483648
      %v610 = vmul.f32 %v608, 1.442695
      %v611 = vpow.pop %v610
      %v612 = vmul.f32 %v609, 1.442695
      %v613 = vpow.pop %v612
      %v614 = vadd.f32 %v611, 1.0
      %v615 = vadd.f32 %v613, 1.0
      %v616 = vrcp.pop %v614
      %v617 = vmul.f32 %v614, %v616
      %v618 = vsub.f32 1.0, %v617
      %v619 = vmul.f32 %v616, %v618
      %v620 = vadd.f32 %v616, %v619
      %vm621 = vweird.f32 %v614
      %vm622 = vweird.f32 %v616
      %vm623 = vmor %vm621, %vm622
      %v624 = vsel %vm623, %v616, %v620
      %v625 = vand.u32 2147483647, %v614
      %vm626 = vcmp.eq.f32.partialorder %v625, 8.507059e+37
      %v627 = vand.u32 %v614, 2147483648
      %v628 = vor.u32 1.1754944e-38, %v627
      %v629 = vsel %vm626, %v628, %v624
      %v630 = vmul.f32 1.0, %v629
      %v631 = vrcp.pop %v615
      %v632 = vmul.f32 %v615, %v631
      %v633 = vsub.f32 1.0, %v632
      %v634 = vmul.f32 %v631, %v633
      %v635 = vadd.f32 %v631, %v634
      %vm636 = vweird.f32 %v615
      %vm637 = vweird.f32 %v631
      %vm638 = vmor %vm636, %vm637
      %v639 = vsel %vm638, %v631, %v635
      %v640 = vand.u32 2147483647, %v615
      %vm641 = vcmp.eq.f32.partialorder %v640, 8.507059e+37
      %v642 = vand.u32 %v615, 2147483648
      %v643 = vor.u32 1.1754944e-38, %v642
      %v644 = vsel %vm641, %v643, %v639
      %v645 = vmul.f32 1.0, %v644
      %v646 = vmul.f32 %v578, %v630
      %v647 = vmul.f32 %v580, %v645
      %v648 = vld [vmem:[%s7] sm:$0x7]
      %vm649 = vcmask 261120
      %650 = vst.msk [vmem:[#allocation2 + $0x8] sm:$0xff] %vm649, %v646
      %651 = vst.msk [vmem:[#allocation2 + $0x10] sm:$0xff] %vm649, %v647
      %v652 = vperm.slane %v648, 2
      %v653 = vmul.f32 %v646, %v652
      %v654 = vmul.f32 %v647, %v652
      %v655 = vld [vmem:[%s8] sm:$0x1]
      %v657 = vperm.slane %v655, 0
      %v659 = vadd.f32 %v653, %v657
      %v660 = vadd.f32 %v654, %v657
      %v661 = vld [vmem:[#allocation2 + $0x6] sm:$0xff]
      %v662 = vld [vmem:[#allocation2 + $0xe] sm:$0xff]
      %v663 = vperm.slane %v648, 0
      %v664 = vmul.f32 %v661, %v663
      %v665 = vmul.f32 %v662, %v663
      %v666 = vadd.f32 %v659, %v664
      %v667 = vadd.f32 %v660, %v665
      %v668 = vld [vmem:[#allocation2 + $0x7] sm:$0xff]
      %v669 = vld [vmem:[#allocation2 + $0xf] sm:$0xff]
      %v670 = vperm.slane %v648, 1
      %v671 = vmul.f32 %v668, %v670
      %v672 = vmul.f32 %v669, %v670
      %v673 = vadd.f32 %v666, %v671
      %v674 = vadd.f32 %v667, %v672
      %v675 = vld [vmem:[#allocation2 + $0x16] sm:$0x3]
      %vm676 = vcmask 254976
      %677 = vst.msk [vmem:[#allocation2 + $0x6] sm:$0x3] %vm676, %v675
      %v678 = vsel %vm649, %v673, 0.0
      %679 = vadd.xlane.f32.xlu0 %v678
      %v680 = vpop.xlane.xlu0 %679
      %v681 = vsel %vm649, %v674, 0.0
      %682 = vadd.xlane.f32.xlu0 %v681
      %v683 = vpop.xlane.xlu0 %682
      %v684 = vmul.f32 %v680, 0.03125
      %v685 = vmul.f32 %v683, 0.03125
      %v686 = vmul.f32 %v673, %v673
      %v687 = vmul.f32 %v674, %v674
      %v688 = vsel %vm649, %v686, 0.0
      %689 = vadd.xlane.f32.xlu0 %v688
      %v690 = vpop.xlane.xlu0 %689
      %v691 = vsel %vm649, %v687, 0.0
      %692 = vadd.xlane.f32.xlu0 %v691
      %v693 = vpop.xlane.xlu0 %692
      %v694 = vmul.f32 %v690, 0.03125
      %v695 = vmul.f32 %v693, 0.03125
      %v696 = vmul.f32 %v684, %v684
      %v697 = vmul.f32 %v685, %v685
      %v698 = vsub.f32 %v694, %v696
      %v699 = vsub.f32 %v695, %v697
      %v700 = vmax.f32 %v698, 0.0
      %v701 = vmax.f32 %v699, 0.0
      %v702 = vsub.f32 %v673, %v684
      %v703 = vsub.f32 %v674, %v685
      %v704 = vadd.f32 %v700, 1e-05
      %v705 = vadd.f32 %v701, 1e-05
      %v706 = vrsqrt.pop %v704
      %v707 = vmul.f32 %v706, %v704
      %v708 = vmul.f32 %v707, %v706
      %v709 = vmul.f32 0.5, %v708
      %v710 = vsub.f32 1.5, %v709
      %v711 = vmul.f32 %v706, %v710
      %vm712 = vweird.f32 %v704
      %vm713 = vweird.f32 %v706
      %vm714 = vmor %vm712, %vm713
      %v715 = vsel %vm714, %v706, %v711
      %v716 = vrsqrt.pop %v705
      %v717 = vmul.f32 %v716, %v705
      %v718 = vmul.f32 %v717, %v716
      %v719 = vmul.f32 0.5, %v718
      %v720 = vsub.f32 1.5, %v719
      %v721 = vmul.f32 %v716, %v720
      %vm722 = vweird.f32 %v705
      %vm723 = vweird.f32 %v716
      %vm724 = vmor %vm722, %vm723
      %v725 = vsel %vm724, %v716, %v721
      %v726 = vmul.f32 %v702, %v715
      %v727 = vmul.f32 %v703, %v725
      %v728 = vld [vmem:[%s9] sm:$0x1]
      %v730 = vperm.slane %v728, 0
      %v732 = vmul.f32 %v726, %v730
      %v733 = vmul.f32 %v727, %v730
      %v734 = vld [vmem:[%s10] sm:$0x1]
      %v736 = vperm.slane %v734, 0
      %v738 = vadd.f32 %v732, %v736
      %v739 = vadd.f32 %v733, %v736
      %v740 = vxor.u32 %v738, 2147483648
      %v741 = vxor.u32 %v739, 2147483648
      %v742 = vmul.f32 %v740, 1.442695
      %v743 = vpow.pop %v742
      %v744 = vmul.f32 %v741, 1.442695
      %v745 = vpow.pop %v744
      %v746 = vadd.f32 %v743, 1.0
      %v747 = vadd.f32 %v745, 1.0
      %v748 = vrcp.pop %v746
      %v749 = vmul.f32 %v746, %v748
      %v750 = vsub.f32 1.0, %v749
      %v751 = vmul.f32 %v748, %v750
      %v752 = vadd.f32 %v748, %v751
      %vm753 = vweird.f32 %v746
      %vm754 = vweird.f32 %v748
      %vm755 = vmor %vm753, %vm754
      %v756 = vsel %vm755, %v748, %v752
      %v757 = vand.u32 2147483647, %v746
      %vm758 = vcmp.eq.f32.partialorder %v757, 8.507059e+37
      %v759 = vand.u32 %v746, 2147483648
      %v760 = vor.u32 1.1754944e-38, %v759
      %v761 = vsel %vm758, %v760, %v756
      %v762 = vmul.f32 1.0, %v761
      %v763 = vrcp.pop %v747
      %v764 = vmul.f32 %v747, %v763
      %v765 = vsub.f32 1.0, %v764
      %v766 = vmul.f32 %v763, %v765
      %v767 = vadd.f32 %v763, %v766
      %vm768 = vweird.f32 %v747
      %vm769 = vweird.f32 %v763
      %vm770 = vmor %vm768, %vm769
      %v771 = vsel %vm770, %v763, %v767
      %v772 = vand.u32 2147483647, %v747
      %vm773 = vcmp.eq.f32.partialorder %v772, 8.507059e+37
      %v774 = vand.u32 %v747, 2147483648
      %v775 = vor.u32 1.1754944e-38, %v774
      %v776 = vsel %vm773, %v775, %v771
      %v777 = vmul.f32 1.0, %v776
      %v778 = vmul.f32 %v738, %v762
      %v779 = vmul.f32 %v739, %v777
      %v780 = vpack.c.bf16 %v779, %v778
      %v781 = vld [vmem:[%s11] sm:$0xf]
      %v782 = vld [vmem:[%s11 + $0x4] sm:$0xf]
      %v783 = vld [vmem:[%s11 + $0x8] sm:$0xf]
      %v784 = vld [vmem:[%s11 + $0xc] sm:$0xf]
      %v785 = vld [vmem:[%s12] sm:$0x1]
      %v787 = vperm.slane %v785, 0
      %v793 = vunpack.c.l.b16 %v781
      %v794 = vunpack.c.l.b16 %v782
      %v795 = vunpack.c.l.b16 %v783
      %v796 = vunpack.c.l.b16 %v784
      %v797 = vpack.c.b16 %v794, %v793
      %v798 = vpack.c.b16 %v796, %v795
      %v802 = vsel %vm649, %v780, 0
      %804 = vmatpush.bf16.msra.mxu0 0
      %805 = vmatpush.bf16.msra.mxu0 0
      %806 = vmatpush.bf16.msra.mxu0 0
      %807 = vmatpush.bf16.msra.mxu0 0
      %808 = vmatpush.bf16.msra.mxu0 0
      %809 = vmatpush.bf16.msra.mxu0 0
      %810 = vmatpush.bf16.msra.mxu0 %v798
      %811 = vmatpush.bf16.msra.mxu0 %v797
      %812 = vmatmul.bf16.gmra.mxu0 %v802
      %v813 = vpop.f32.mrf.mxu0
      %v814 = vadd.f32 %v787, %v813
      %v815 = vpop.f32.mrf.mxu0
      %v816 = vadd.f32 %v787, %v815
      %817 = vdwg.mxu0
      %818 = vst.msk [vmem:[%s478] sm:$0xff] %vm489, %v814
      %819 = vst.msk [vmem:[%s478 + $0x8] sm:$0xff] %vm489, %v816
      %s820 = smul.u32 2, %s29
      %p821 = scmp.lt.s32.totalorder %s28, 1
      %s822 = scalar_select %p821, %s28, 1
      %p823 = scmp.lt.s32.totalorder %s820, 3
      %s824 = scalar_select %p823, %s820, 3
      %s825 = smul.addr %s822, 4
      %s826 = sadd.s32 %s824, %s825
      %s827 = smul.addr %s826, 8
      %s828 = scalar_lea.vmem %s13, %s827
      // Predicated region
      $region77: #{tpu_custom_call.1} parent=71 // pred_check
        %p829 = pneg %p336
      $region78: #{tpu_custom_call.1} parent=71 // pred_check_branch
        %831 = sbr.rel (%p829) target = $region80
      $region79: #{tpu_custom_call.1} parent=71 // pred_region
        %s832 = smul.u32 2, %s29
      $region80: #{tpu_custom_call.1} parent=71 // pred_fallthru
        _
    $region72: #{tpu_custom_call.1} parent=5 // pred_fallthru
      _
    %p833 = scmp.le.s32.totalorder 2, %s19
    // Predicated region
    $region81: #{tpu_custom_call.1} parent=5 // pred_check
      %p834 = pneg %p833
    $region82: #{tpu_custom_call.1} parent=5 // pred_check_branch
      %836 = sbr.rel (%p834) target = $region84
    $region83: #{tpu_custom_call.1} parent=5 // pred_region
      %s837 = ssub.s32 %s19, 2
      // Predicated region
      $region85: #{tpu_custom_call.1} parent=83 // pred_check
        %p838 = pneg %p342
      $region86: #{tpu_custom_call.1} parent=83 // pred_check_branch
        %840 = sbr.rel (%p838) target = $region88
      $region87: #{tpu_custom_call.1} parent=83 // pred_region
        %s841 = smul.u32 2, %s31
        %p842 = scmp.lt.s32.totalorder %s30, 1
        %s843 = scalar_select %p842, %s30, 1
        %p844 = scmp.lt.s32.totalorder %s841, 3
        %s845 = scalar_select %p844, %s841, 3
        %s846 = smul.addr %s843, 4
        %s847 = sadd.s32 %s845, %s846
        %s848 = smul.addr %s847, 8
        %s849 = scalar_lea.vmem %s13, %s848
      $region88: #{tpu_custom_call.1} parent=83 // pred_fallthru
        _
    $region84: #{tpu_custom_call.1} parent=5 // pred_fallthru
      _
  $region6: #{tpu_custom_call.1} parent=0 // loop_footer
    %s23 = sadd.s32 1, %s19
  $region7: #{tpu_custom_call.1} parent=0 // loop_footer_branch
    %18 = sbr.rel target = $region3
  $region8: #{tpu_custom_call.1} parent=0 // loop_exit
    _

// kernel: tpu_custom_call.1
$region0: #{tpu_custom_call.1}
  #allocation0 [shape = 'u32[]', space=smem, size = 0x4, offset = 0x4, fixed_abs, tag = 'smem constant byte address 0x4 - core index']
  #allocation1 [shape = 'u32[72,128]{1,0:T(1,128)}', space=vmem, size = 0x9000, scoped, tag = 'internal scratch']
  #allocation2 [shape = 'f32[24,32]{1,0:T(8,128)}', space=vmem, size = 0x3000, scoped, tag = 'scratch operand']
  %s0 = inlined_call_operand.vmem [shape: f32[2,32,16], index: 0, kind: input, shape index: {}]
  %s1 = inlined_call_operand.vmem [shape: f32[1,16], index: 1, kind: input, shape index: {}]
  %s2 = inlined_call_operand.vmem [shape: f32[1,16], index: 2, kind: input, shape index: {}]
  %s3 = inlined_call_operand.vmem [shape: bf16[16,32], index: 3, kind: input, shape index: {}]
  %s4 = inlined_call_operand.vmem [shape: bf16[16,32], index: 4, kind: input, shape index: {}]
  %s5 = inlined_call_operand.vmem [shape: f32[1,32], index: 5, kind: input, shape index: {}]
  %s6 = inlined_call_operand.vmem [shape: f32[1,32], index: 6, kind: input, shape index: {}]
  %s7 = inlined_call_operand.vmem [shape: f32[3,32], index: 7, kind: input, shape index: {}]
  %s8 = inlined_call_operand.vmem [shape: f32[1,32], index: 8, kind: input, shape index: {}]
  %s9 = inlined_call_operand.vmem [shape: f32[1,32], index: 9, kind: input, shape index: {}]
  %s10 = inlined_call_operand.vmem [shape: f32[1,32], index: 10, kind: input, shape index: {}]
  %s11 = inlined_call_operand.vmem [shape: bf16[32,16], index: 11, kind: input, shape index: {}]
  %s12 = inlined_call_operand.vmem [shape: f32[1,16], index: 12, kind: input, shape index: {}]
  %s13 = inlined_call_operand.vmem [shape: f32[2,32,16], index: 13, kind: output, shape index: {}]
  %s14 = sld [smem:[#allocation0]]
  $region89: #{tpu_custom_call.1} parent=0
    _
  %s16 = ssub.s32 1, %s14
  %s17 = scalar_select 0, %s16, %s14
  loop: start=0, step=1, limit=6
  $region2: #{tpu_custom_call.1} parent=0 // loop_pre_header
    _
  $region3: #{tpu_custom_call.1} parent=0 // loop_header
    %s19 = sphi 0, %s23
    %p20 = scmp.ge.s32.totalorder %s19, 6
    %s26 = sphi 0, %s38
    %s27 = sphi 0, %s34
    %s28 = sphi 0, %s26
    %s29 = sphi 0, %s27
    %s30 = sphi 0, %s28
    %s31 = sphi 0, %s29
    %s43 = sphi 0, %s45
    %s46 = sphi 0, %s43
    %s47 = sphi 0, %s46
    %s63 = sphi 0, %s47
    %s67 = sphi 0, %s67
    %s69 = sphi 0, %s67
    %s70 = sphi 0, %s69
    %s84 = sphi 0, %s70
    %s88 = sphi 0, %s88
    %s90 = sphi 0, %s88
    %s91 = sphi 0, %s90
    %s105 = sphi 0, %s91
    %s109 = sphi 0, %s109
    %s111 = sphi 0, %s109
    %s112 = sphi 0, %s111
    %s126 = sphi 0, %s112
    %s130 = sphi 0, %s130
    %s132 = sphi 0, %s130
    %s133 = sphi 0, %s132
    %s147 = sphi 0, %s133
    %s151 = sphi 0, %s151
    %s153 = sphi 0, %s151
    %s154 = sphi 0, %s153
    %s168 = sphi 0, %s154
    %s172 = sphi 0, %s172
    %s174 = sphi 0, %s172
    %s175 = sphi 0, %s174
    %s189 = sphi 0, %s175
    %s193 = sphi 0, %s193
    %s195 = sphi 0, %s193
    %s196 = sphi 0, %s195
    %s210 = sphi 0, %s196
    %s214 = sphi 0, %s214
    %s216 = sphi 0, %s214
    %s217 = sphi 0, %s216
    %s231 = sphi 0, %s217
    %s235 = sphi 0, %s235
    %s237 = sphi 0, %s235
    %s238 = sphi 0, %s237
    %s252 = sphi 0, %s238
    %s256 = sphi 0, %s256
    %s258 = sphi 0, %s256
    %s259 = sphi 0, %s258
    %s273 = sphi 0, %s259
    %s277 = sphi 0, %s277
    %s279 = sphi 0, %s277
    %s280 = sphi 0, %s279
    %s294 = sphi 0, %s280
    %s298 = sphi 0, %s298
    %s300 = sphi 0, %s298
    %s301 = sphi 0, %s300
    %s315 = sphi 0, %s301
    %s323 = sphi 0, %s325
    %s326 = sphi 0, %s323
    %s327 = sphi 0, %s326
    %s343 = sphi 0, %s327
  $region4: #{tpu_custom_call.1} parent=0 // loop_header_branch
    %22 = sbr.rel (%p20) target = $region8
  $region5: #{tpu_custom_call.1} parent=0 // loop_body
    %s24 = ssub.s32 %s19, 1
    %s25 = ssub.s32 %s19, 2
    %s32 = sadd.s32 1, %s27
    %p33 = scmp.ge.s32.totalorder %s32, 2
    %s34 = scalar_select %p33, 0, %s32
    %s35 = sadd.s32 1, %s26
    %s36 = scalar_select %p33, %s35, %s26
    %p37 = scmp.ge.s32.totalorder %s36, 2
    %s38 = scalar_select %p37, 0, %s36
    %s39 = ssub.s32 %s26, %s38
    %s40 = ssub.s32 %s27, %s34
    %s41 = sor.u32 %s39, %s40
    %p42 = scmp.eq.s32.totalorder %s41, 0
    %s44 = sadd.s32 %s43, 1
    %s45 = scalar_select %p42, %s43, %s44
    %p48 = pneg %p42
    %p49 = scmp.eq.s32.totalorder %s19, 3
    %p50 = por %p48, %p49
    %p51 = scmp.ne.s32.totalorder %s43, %s46
    %p52 = scmp.eq.s32.totalorder %s19, 0
    %p53 = por %p51, %p52
    %p54 = scmp.ne.s32.totalorder %s43, %s46
    %p55 = scmp.eq.s32.totalorder %s24, 3
    %p56 = por %p54, %p55
    %p57 = scmp.ne.s32.totalorder %s46, %s47
    %p58 = scmp.eq.s32.totalorder %s24, 0
    %p59 = por %p57, %p58
    %p60 = scmp.ne.s32.totalorder %s46, %s47
    %p61 = scmp.eq.s32.totalorder %s25, 3
    %p62 = por %p60, %p61
    %p64 = scmp.ne.s32.totalorder %s47, %s63
    %p65 = scmp.eq.s32.totalorder %s25, 0
    %p66 = por %p64, %p65
    %s68 = sadd.s32 %s67, 1
    %p71 = scmp.eq.s32.totalorder %s19, 3
    %p72 = scmp.ne.s32.totalorder %s67, %s69
    %p73 = scmp.eq.s32.totalorder %s19, 0
    %p74 = por %p72, %p73
    %p75 = scmp.ne.s32.totalorder %s67, %s69
    %p76 = scmp.eq.s32.totalorder %s24, 3
    %p77 = por %p75, %p76
    %p78 = scmp.ne.s32.totalorder %s69, %s70
    %p79 = scmp.eq.s32.totalorder %s24, 0
    %p80 = por %p78, %p79
    %p81 = scmp.ne.s32.totalorder %s69, %s70
    %p82 = scmp.eq.s32.totalorder %s25, 3
    %p83 = por %p81, %p82
    %p85 = scmp.ne.s32.totalorder %s70, %s84
    %p86 = scmp.eq.s32.totalorder %s25, 0
    %p87 = por %p85, %p86
    %s89 = sadd.s32 %s88, 1
    %p92 = scmp.eq.s32.totalorder %s19, 3
    %p93 = scmp.ne.s32.totalorder %s88, %s90
    %p94 = scmp.eq.s32.totalorder %s19, 0
    %p95 = por %p93, %p94
    %p96 = scmp.ne.s32.totalorder %s88, %s90
    %p97 = scmp.eq.s32.totalorder %s24, 3
    %p98 = por %p96, %p97
    %p99 = scmp.ne.s32.totalorder %s90, %s91
    %p100 = scmp.eq.s32.totalorder %s24, 0
    %p101 = por %p99, %p100
    %p102 = scmp.ne.s32.totalorder %s90, %s91
    %p103 = scmp.eq.s32.totalorder %s25, 3
    %p104 = por %p102, %p103
    %p106 = scmp.ne.s32.totalorder %s91, %s105
    %p107 = scmp.eq.s32.totalorder %s25, 0
    %p108 = por %p106, %p107
    %s110 = sadd.s32 %s109, 1
    %p113 = scmp.eq.s32.totalorder %s19, 3
    %p114 = scmp.ne.s32.totalorder %s109, %s111
    %p115 = scmp.eq.s32.totalorder %s19, 0
    %p116 = por %p114, %p115
    %p117 = scmp.ne.s32.totalorder %s109, %s111
    %p118 = scmp.eq.s32.totalorder %s24, 3
    %p119 = por %p117, %p118
    %p120 = scmp.ne.s32.totalorder %s111, %s112
    %p121 = scmp.eq.s32.totalorder %s24, 0
    %p122 = por %p120, %p121
    %p123 = scmp.ne.s32.totalorder %s111, %s112
    %p124 = scmp.eq.s32.totalorder %s25, 3
    %p125 = por %p123, %p124
    %p127 = scmp.ne.s32.totalorder %s112, %s126
    %p128 = scmp.eq.s32.totalorder %s25, 0
    %p129 = por %p127, %p128
    %s131 = sadd.s32 %s130, 1
    %p134 = scmp.eq.s32.totalorder %s19, 3
    %p135 = scmp.ne.s32.totalorder %s130, %s132
    %p136 = scmp.eq.s32.totalorder %s19, 0
    %p137 = por %p135, %p136
    %p138 = scmp.ne.s32.totalorder %s130, %s132
    %p139 = scmp.eq.s32.totalorder %s24, 3
    %p140 = por %p138, %p139
    %p141 = scmp.ne.s32.totalorder %s132, %s133
    %p142 = scmp.eq.s32.totalorder %s24, 0
    %p143 = por %p141, %p142
    %p144 = scmp.ne.s32.totalorder %s132, %s133
    %p145 = scmp.eq.s32.totalorder %s25, 3
    %p146 = por %p144, %p145
    %p148 = scmp.ne.s32.totalorder %s133, %s147
    %p149 = scmp.eq.s32.totalorder %s25, 0
    %p150 = por %p148, %p149
    %s152 = sadd.s32 %s151, 1
    %p155 = scmp.eq.s32.totalorder %s19, 3
    %p156 = scmp.ne.s32.totalorder %s151, %s153
    %p157 = scmp.eq.s32.totalorder %s19, 0
    %p158 = por %p156, %p157
    %p159 = scmp.ne.s32.totalorder %s151, %s153
    %p160 = scmp.eq.s32.totalorder %s24, 3
    %p161 = por %p159, %p160
    %p162 = scmp.ne.s32.totalorder %s153, %s154
    %p163 = scmp.eq.s32.totalorder %s24, 0
    %p164 = por %p162, %p163
    %p165 = scmp.ne.s32.totalorder %s153, %s154
    %p166 = scmp.eq.s32.totalorder %s25, 3
    %p167 = por %p165, %p166
    %p169 = scmp.ne.s32.totalorder %s154, %s168
    %p170 = scmp.eq.s32.totalorder %s25, 0
    %p171 = por %p169, %p170
    %s173 = sadd.s32 %s172, 1
    %p176 = scmp.eq.s32.totalorder %s19, 3
    %p177 = scmp.ne.s32.totalorder %s172, %s174
    %p178 = scmp.eq.s32.totalorder %s19, 0
    %p179 = por %p177, %p178
    %p180 = scmp.ne.s32.totalorder %s172, %s174
    %p181 = scmp.eq.s32.totalorder %s24, 3
    %p182 = por %p180, %p181
    %p183 = scmp.ne.s32.totalorder %s174, %s175
    %p184 = scmp.eq.s32.totalorder %s24, 0
    %p185 = por %p183, %p184
    %p186 = scmp.ne.s32.totalorder %s174, %s175
    %p187 = scmp.eq.s32.totalorder %s25, 3
    %p188 = por %p186, %p187
    %p190 = scmp.ne.s32.totalorder %s175, %s189
    %p191 = scmp.eq.s32.totalorder %s25, 0
    %p192 = por %p190, %p191
    %s194 = sadd.s32 %s193, 1
    %p197 = scmp.eq.s32.totalorder %s19, 3
    %p198 = scmp.ne.s32.totalorder %s193, %s195
    %p199 = scmp.eq.s32.totalorder %s19, 0
    %p200 = por %p198, %p199
    %p201 = scmp.ne.s32.totalorder %s193, %s195
    %p202 = scmp.eq.s32.totalorder %s24, 3
    %p203 = por %p201, %p202
    %p204 = scmp.ne.s32.totalorder %s195, %s196
    %p205 = scmp.eq.s32.totalorder %s24, 0
    %p206 = por %p204, %p205
    %p207 = scmp.ne.s32.totalorder %s195, %s196
    %p208 = scmp.eq.s32.totalorder %s25, 3
    %p209 = por %p207, %p208
    %p211 = scmp.ne.s32.totalorder %s196, %s210
    %p212 = scmp.eq.s32.totalorder %s25, 0
    %p213 = por %p211, %p212
    %s215 = sadd.s32 %s214, 1
    %p218 = scmp.eq.s32.totalorder %s19, 3
    %p219 = scmp.ne.s32.totalorder %s214, %s216
    %p220 = scmp.eq.s32.totalorder %s19, 0
    %p221 = por %p219, %p220
    %p222 = scmp.ne.s32.totalorder %s214, %s216
    %p223 = scmp.eq.s32.totalorder %s24, 3
    %p224 = por %p222, %p223
    %p225 = scmp.ne.s32.totalorder %s216, %s217
    %p226 = scmp.eq.s32.totalorder %s24, 0
    %p227 = por %p225, %p226
    %p228 = scmp.ne.s32.totalorder %s216, %s217
    %p229 = scmp.eq.s32.totalorder %s25, 3
    %p230 = por %p228, %p229
    %p232 = scmp.ne.s32.totalorder %s217, %s231
    %p233 = scmp.eq.s32.totalorder %s25, 0
    %p234 = por %p232, %p233
    %s236 = sadd.s32 %s235, 1
    %p239 = scmp.eq.s32.totalorder %s19, 3
    %p240 = scmp.ne.s32.totalorder %s235, %s237
    %p241 = scmp.eq.s32.totalorder %s19, 0
    %p242 = por %p240, %p241
    %p243 = scmp.ne.s32.totalorder %s235, %s237
    %p244 = scmp.eq.s32.totalorder %s24, 3
    %p245 = por %p243, %p244
    %p246 = scmp.ne.s32.totalorder %s237, %s238
    %p247 = scmp.eq.s32.totalorder %s24, 0
    %p248 = por %p246, %p247
    %p249 = scmp.ne.s32.totalorder %s237, %s238
    %p250 = scmp.eq.s32.totalorder %s25, 3
    %p251 = por %p249, %p250
    %p253 = scmp.ne.s32.totalorder %s238, %s252
    %p254 = scmp.eq.s32.totalorder %s25, 0
    %p255 = por %p253, %p254
    %s257 = sadd.s32 %s256, 1
    %p260 = scmp.eq.s32.totalorder %s19, 3
    %p261 = scmp.ne.s32.totalorder %s256, %s258
    %p262 = scmp.eq.s32.totalorder %s19, 0
    %p263 = por %p261, %p262
    %p264 = scmp.ne.s32.totalorder %s256, %s258
    %p265 = scmp.eq.s32.totalorder %s24, 3
    %p266 = por %p264, %p265
    %p267 = scmp.ne.s32.totalorder %s258, %s259
    %p268 = scmp.eq.s32.totalorder %s24, 0
    %p269 = por %p267, %p268
    %p270 = scmp.ne.s32.totalorder %s258, %s259
    %p271 = scmp.eq.s32.totalorder %s25, 3
    %p272 = por %p270, %p271
    %p274 = scmp.ne.s32.totalorder %s259, %s273
    %p275 = scmp.eq.s32.totalorder %s25, 0
    %p276 = por %p274, %p275
    %s278 = sadd.s32 %s277, 1
    %p281 = scmp.eq.s32.totalorder %s19, 3
    %p282 = scmp.ne.s32.totalorder %s277, %s279
    %p283 = scmp.eq.s32.totalorder %s19, 0
    %p284 = por %p282, %p283
    %p285 = scmp.ne.s32.totalorder %s277, %s279
    %p286 = scmp.eq.s32.totalorder %s24, 3
    %p287 = por %p285, %p286
    %p288 = scmp.ne.s32.totalorder %s279, %s280
    %p289 = scmp.eq.s32.totalorder %s24, 0
    %p290 = por %p288, %p289
    %p291 = scmp.ne.s32.totalorder %s279, %s280
    %p292 = scmp.eq.s32.totalorder %s25, 3
    %p293 = por %p291, %p292
    %p295 = scmp.ne.s32.totalorder %s280, %s294
    %p296 = scmp.eq.s32.totalorder %s25, 0
    %p297 = por %p295, %p296
    %s299 = sadd.s32 %s298, 1
    %p302 = scmp.eq.s32.totalorder %s19, 3
    %p303 = scmp.ne.s32.totalorder %s298, %s300
    %p304 = scmp.eq.s32.totalorder %s19, 0
    %p305 = por %p303, %p304
    %p306 = scmp.ne.s32.totalorder %s298, %s300
    %p307 = scmp.eq.s32.totalorder %s24, 3
    %p308 = por %p306, %p307
    %p309 = scmp.ne.s32.totalorder %s300, %s301
    %p310 = scmp.eq.s32.totalorder %s24, 0
    %p311 = por %p309, %p310
    %p312 = scmp.ne.s32.totalorder %s300, %s301
    %p313 = scmp.eq.s32.totalorder %s25, 3
    %p314 = por %p312, %p313
    %p316 = scmp.ne.s32.totalorder %s301, %s315
    %p317 = scmp.eq.s32.totalorder %s25, 0
    %p318 = por %p316, %p317
    %s319 = ssub.s32 %s26, %s38
    %s320 = ssub.s32 %s27, %s34
    %s321 = sor.u32 %s319, %s320
    %p322 = scmp.eq.s32.totalorder %s321, 0
    %s324 = sadd.s32 %s323, 1
    %s325 = scalar_select %p322, %s323, %s324
    %p328 = pneg %p322
    %p329 = scmp.eq.s32.totalorder %s19, 3
    %p330 = por %p328, %p329
    %p331 = scmp.ne.s32.totalorder %s323, %s326
    %p332 = scmp.eq.s32.totalorder %s19, 0
    %p333 = por %p331, %p332
    %p334 = scmp.ne.s32.totalorder %s323, %s326
    %p335 = scmp.eq.s32.totalorder %s24, 3
    %p336 = por %p334, %p335
    %p337 = scmp.ne.s32.totalorder %s326, %s327
    %p338 = scmp.eq.s32.totalorder %s24, 0
    %p339 = por %p337, %p338
    %p340 = scmp.ne.s32.totalorder %s326, %s327
    %p341 = scmp.eq.s32.totalorder %s25, 3
    %p342 = por %p340, %p341
    %p344 = scmp.ne.s32.totalorder %s327, %s343
    %p345 = scmp.eq.s32.totalorder %s25, 0
    %p346 = por %p344, %p345
    %p347 = scmp.le.s32.totalorder 1, %s19
    %p348 = scmp.lt.s32.totalorder %s19, 5
    %p349 = pnand %p347, %p348
    %p350 = pneg %p349
    // Predicated region
    $region9: #{tpu_custom_call.1} parent=5 // pred_check
      _
    $region10: #{tpu_custom_call.1} parent=5 // pred_check_branch
      %352 = sbr.rel (%p349) target = $region12
    $region11: #{tpu_custom_call.1} parent=5 // pred_region
      %s353 = ssub.s32 %s19, 1
      // Predicated region
      $region13: #{tpu_custom_call.1} parent=11 // pred_check
        %p354 = pneg %p80
      $region14: #{tpu_custom_call.1} parent=11 // pred_check_branch
        %356 = sbr.rel (%p354) target = $region16
      $region15: #{tpu_custom_call.1} parent=11 // pred_region
        _
      $region16: #{tpu_custom_call.1} parent=11 // pred_fallthru
        _
      // Predicated region
      $region17: #{tpu_custom_call.1} parent=11 // pred_check
        %p357 = pneg %p101
      $region18: #{tpu_custom_call.1} parent=11 // pred_check_branch
        %359 = sbr.rel (%p357) target = $region20
      $region19: #{tpu_custom_call.1} parent=11 // pred_region
        _
      $region20: #{tpu_custom_call.1} parent=11 // pred_fallthru
        _
      // Predicated region
      $region21: #{tpu_custom_call.1} parent=11 // pred_check
        %p360 = pneg %p122
      $region22: #{tpu_custom_call.1} parent=11 // pred_check_branch
        %362 = sbr.rel (%p360) target = $region24
      $region23: #{tpu_custom_call.1} parent=11 // pred_region
        _
      $region24: #{tpu_custom_call.1} parent=11 // pred_fallthru
        _
      // Predicated region
      $region25: #{tpu_custom_call.1} parent=11 // pred_check
        %p363 = pneg %p143
      $region26: #{tpu_custom_call.1} parent=11 // pred_check_branch
        %365 = sbr.rel (%p363) target = $region28
      $region27: #{tpu_custom_call.1} parent=11 // pred_region
        _
      $region28: #{tpu_custom_call.1} parent=11 // pred_fallthru
        _
      // Predicated region
      $region29: #{tpu_custom_call.1} parent=11 // pred_check
        %p366 = pneg %p164
      $region30: #{tpu_custom_call.1} parent=11 // pred_check_branch
        %368 = sbr.rel (%p366) target = $region32
      $region31: #{tpu_custom_call.1} parent=11 // pred_region
        _
      $region32: #{tpu_custom_call.1} parent=11 // pred_fallthru
        _
      // Predicated region
      $region33: #{tpu_custom_call.1} parent=11 // pred_check
        %p369 = pneg %p185
      $region34: #{tpu_custom_call.1} parent=11 // pred_check_branch
        %371 = sbr.rel (%p369) target = $region36
      $region35: #{tpu_custom_call.1} parent=11 // pred_region
        _
      $region36: #{tpu_custom_call.1} parent=11 // pred_fallthru
        _
      // Predicated region
      $region37: #{tpu_custom_call.1} parent=11 // pred_check
        %p372 = pneg %p206
      $region38: #{tpu_custom_call.1} parent=11 // pred_check_branch
        %374 = sbr.rel (%p372) target = $region40
      $region39: #{tpu_custom_call.1} parent=11 // pred_region
        _
      $region40: #{tpu_custom_call.1} parent=11 // pred_fallthru
        _
      // Predicated region
      $region41: #{tpu_custom_call.1} parent=11 // pred_check
        %p375 = pneg %p227
      $region42: #{tpu_custom_call.1} parent=11 // pred_check_branch
        %377 = sbr.rel (%p375) target = $region44
      $region43: #{tpu_custom_call.1} parent=11 // pred_region
        _
      $region44: #{tpu_custom_call.1} parent=11 // pred_fallthru
        _
      // Predicated region
      $region45: #{tpu_custom_call.1} parent=11 // pred_check
        %p378 = pneg %p248
      $region46: #{tpu_custom_call.1} parent=11 // pred_check_branch
        %380 = sbr.rel (%p378) target = $region48
      $region47: #{tpu_custom_call.1} parent=11 // pred_region
        _
      $region48: #{tpu_custom_call.1} parent=11 // pred_fallthru
        _
      // Predicated region
      $region49: #{tpu_custom_call.1} parent=11 // pred_check
        %p381 = pneg %p269
      $region50: #{tpu_custom_call.1} parent=11 // pred_check_branch
        %383 = sbr.rel (%p381) target = $region52
      $region51: #{tpu_custom_call.1} parent=11 // pred_region
        _
      $region52: #{tpu_custom_call.1} parent=11 // pred_fallthru
        _
      // Predicated region
      $region53: #{tpu_custom_call.1} parent=11 // pred_check
        %p384 = pneg %p290
      $region54: #{tpu_custom_call.1} parent=11 // pred_check_branch
        %386 = sbr.rel (%p384) target = $region56
      $region55: #{tpu_custom_call.1} parent=11 // pred_region
        _
      $region56: #{tpu_custom_call.1} parent=11 // pred_fallthru
        _
      // Predicated region
      $region57: #{tpu_custom_call.1} parent=11 // pred_check
        %p387 = pneg %p311
      $region58: #{tpu_custom_call.1} parent=11 // pred_check_branch
        %389 = sbr.rel (%p387) target = $region60
      $region59: #{tpu_custom_call.1} parent=11 // pred_region
        _
      $region60: #{tpu_custom_call.1} parent=11 // pred_fallthru
        _
    $region12: #{tpu_custom_call.1} parent=5 // pred_fallthru
      _
    %p390 = scmp.lt.s32.totalorder %s19, 4
    // Predicated region
    $region61: #{tpu_custom_call.1} parent=5 // pred_check
      %p391 = pneg %p390
    $region62: #{tpu_custom_call.1} parent=5 // pred_check_branch
      %393 = sbr.rel (%p391) target = $region64
    $region63: #{tpu_custom_call.1} parent=5 // pred_region
      // Predicated region
      $region65: #{tpu_custom_call.1} parent=63 // pred_check
        %p394 = pneg %p53
      $region66: #{tpu_custom_call.1} parent=63 // pred_check_branch
        %396 = sbr.rel (%p394) target = $region68
      $region67: #{tpu_custom_call.1} parent=63 // pred_region
        %s397 = smul.u32 2, %s27
        %p398 = scmp.lt.s32.totalorder %s26, 1
        %s399 = scalar_select %p398, %s26, 1
        %p400 = scmp.lt.s32.totalorder %s397, 3
        %s401 = scalar_select %p400, %s397, 3
        %s402 = smul.addr %s399, 4
        %s403 = sadd.s32 %s401, %s402
        %s404 = smul.addr %s403, 8
        %s405 = scalar_lea.vmem %s0, %s404
        %s406 = smul.u32 2, %s27
      $region68: #{tpu_custom_call.1} parent=63 // pred_fallthru
        _
    $region64: #{tpu_custom_call.1} parent=5 // pred_fallthru
      _
    %p407 = scmp.le.s32.totalorder 1, %s19
    %p408 = scmp.lt.s32.totalorder %s19, 5
    %p409 = pnand %p407, %p408
    %p410 = pneg %p409
    // Predicated region
    $region69: #{tpu_custom_call.1} parent=5 // pred_check
      _
    $region70: #{tpu_custom_call.1} parent=5 // pred_check_branch
      %412 = sbr.rel (%p409) target = $region72
    $region71: #{tpu_custom_call.1} parent=5 // pred_region
      %s413 = ssub.s32 %s19, 1
      %s414 = smul.u32 2, %s29
      %p415 = scmp.lt.s32.totalorder %s28, 1
      %s416 = scalar_select %p415, %s28, 1
      %p417 = scmp.lt.s32.totalorder %s414, 3
      %s418 = scalar_select %p417, %s414, 3
      %s419 = smul.addr %s416, 4
      %s420 = sadd.s32 %s418, %s419
      %s421 = smul.addr %s420, 8
      %s422 = scalar_lea.vmem %s0, %s421
      %p423 = pneg %p59
      %p424 = pneg %p56
      %p425 = pneg %p80
      %p426 = pneg %p77
      %p427 = pneg %p101
      %p428 = pneg %p98
      %p429 = pneg %p122
      %p430 = pneg %p119
      %p431 = pneg %p143
      %p432 = pneg %p140
      %p433 = pneg %p164
      %p434 = pneg %p161
      %p435 = pneg %p185
      %p436 = pneg %p182
      %p437 = pneg %p206
      %p438 = pneg %p203
      %p439 = pneg %p227
      %p440 = pneg %p224
      %p441 = pneg %p248
      %p442 = pneg %p245
      %p443 = pneg %p269
      %p444 = pneg %p266
      %p445 = pneg %p290
      %p446 = pneg %p287
      %p447 = pneg %p311
      %p448 = pneg %p308
      %p449 = pneg %p339
      %p450 = pneg %p336
      %s451 = smul.u32 2, %s29
      %p452 = scmp.lt.s32.totalorder %s28, 1
      %s453 = scalar_select %p452, %s28, 1
      %p454 = scmp.lt.s32.totalorder %s451, 3
      %s455 = scalar_select %p454, %s451, 3
      %s456 = smul.addr %s453, 4
      %s457 = sadd.s32 %s455, %s456
      %s458 = smul.addr %s457, 8
      %s459 = scalar_lea.vmem %s13, %s458
      %s460 = smul.u32 2, %s29
      %p461 = scmp.lt.s32.totalorder %s28, 1
      %s462 = scalar_select %p461, %s28, 1
      %p463 = scmp.lt.s32.totalorder %s460, 3
      %s464 = scalar_select %p463, %s460, 3
      %s465 = smul.addr %s462, 4
      %s466 = sadd.s32 %s464, %s465
      %s467 = smul.addr %s466, 8
      %s468 = scalar_lea.vmem %s0, %s467
      %s469 = smul.u32 2, %s29
      %s470 = smul.u32 2, %s29
      %p471 = scmp.lt.s32.totalorder %s28, 1
      %s472 = scalar_select %p471, %s28, 1
      %p473 = scmp.lt.s32.totalorder %s470, 3
      %s474 = scalar_select %p473, %s470, 3
      %s475 = smul.addr %s472, 4
      %s476 = sadd.s32 %s474, %s475
      %s477 = smul.addr %s476, 8
      %s478 = scalar_lea.vmem %s13, %s477
      %s479 = smul.u32 2, %s29
      %p481 = scmp.eq.s32.totalorder %s29, 0
      // Predicated region
      $region73: #{tpu_custom_call.1} parent=71 // pred_check
        %p482 = pneg %p481
      $region74: #{tpu_custom_call.1} parent=71 // pred_check_branch
        %484 = sbr.rel (%p482) target = $region76
      $region75: #{tpu_custom_call.1} parent=71 // pred_region
        %vm485 = vcmask 261120
        %486 = vst.msk [vmem:[#allocation2] sm:$0xff] %vm485, 0.0
      $region76: #{tpu_custom_call.1} parent=71 // pred_fallthru
        _
      %v487 = vld [vmem:[%s468] sm:$0xff]
      %v488 = vld [vmem:[%s468 + $0x8] sm:$0xff]
      %vm489 = vcmask 130048
      %v490 = vsel %vm489, %v487, 0.0
      %491 = vadd.xlane.f32.xlu0 %v490
      %v492 = vpop.xlane.xlu0 %491
      %v493 = vsel %vm489, %v488, 0.0
      %494 = vadd.xlane.f32.xlu0 %v493
      %v495 = vpop.xlane.xlu0 %494
      %v496 = vmul.f32 %v492, 0.0625
      %v497 = vmul.f32 %v495, 0.0625
      %v498 = vmul.f32 %v487, %v487
      %v499 = vmul.f32 %v488, %v488
      %v500 = vsel %vm489, %v498, 0.0
      %501 = vadd.xlane.f32.xlu0 %v500
      %v502 = vpop.xlane.xlu0 %501
      %v503 = vsel %vm489, %v499, 0.0
      %504 = vadd.xlane.f32.xlu0 %v503
      %v505 = vpop.xlane.xlu0 %504
      %v506 = vmul.f32 %v502, 0.0625
      %v507 = vmul.f32 %v505, 0.0625
      %v508 = vmul.f32 %v496, %v496
      %v509 = vmul.f32 %v497, %v497
      %v510 = vsub.f32 %v506, %v508
      %v511 = vsub.f32 %v507, %v509
      %v512 = vmax.f32 %v510, 0.0
      %v513 = vmax.f32 %v511, 0.0
      %v514 = vsub.f32 %v487, %v496
      %v515 = vsub.f32 %v488, %v497
      %v516 = vadd.f32 %v512, 1e-05
      %v517 = vadd.f32 %v513, 1e-05
      %v518 = vrsqrt.pop %v516
      %v519 = vmul.f32 %v518, %v516
      %v520 = vmul.f32 %v519, %v518
      %v521 = vmul.f32 0.5, %v520
      %v522 = vsub.f32 1.5, %v521
      %v523 = vmul.f32 %v518, %v522
      %vm524 = vweird.f32 %v516
      %vm525 = vweird.f32 %v518
      %vm526 = vmor %vm524, %vm525
      %v527 = vsel %vm526, %v518, %v523
      %v528 = vrsqrt.pop %v517
      %v529 = vmul.f32 %v528, %v517
      %v530 = vmul.f32 %v529, %v528
      %v531 = vmul.f32 0.5, %v530
      %v532 = vsub.f32 1.5, %v531
      %v533 = vmul.f32 %v528, %v532
      %vm534 = vweird.f32 %v517
      %vm535 = vweird.f32 %v528
      %vm536 = vmor %vm534, %vm535
      %v537 = vsel %vm536, %v528, %v533
      %v538 = vmul.f32 %v514, %v527
      %v539 = vmul.f32 %v515, %v537
      %v540 = vld [vmem:[%s1] sm:$0x1]
      %v542 = vperm.slane %v540, 0
      %v544 = vmul.f32 %v538, %v542
      %v545 = vmul.f32 %v539, %v542
      %v546 = vld [vmem:[%s2] sm:$0x1]
      %v548 = vperm.slane %v546, 0
      %v550 = vadd.f32 %v544, %v548
      %v551 = vadd.f32 %v545, %v548
      %v552 = vpack.c.bf16 %v551, %v550
      %v553 = vld [vmem:[%s3] sm:$0xf]
      %v554 = vld [vmem:[%s3 + $0x4] sm:$0xf]
      %v555 = vld [vmem:[%s5] sm:$0x1]
      %v557 = vperm.slane %v555, 0
      %v561 = vunpack.c.l.b16 %v553
      %v562 = vunpack.c.l.b16 %v554
      %v563 = vpack.c.b16 %v562, %v561
      %v566 = vsel %vm489, %v552, 0
      %568 = vmatpush.bf16.msra.mxu0 0
      %569 = vmatpush.bf16.msra.mxu0 0
      %570 = vmatpush.bf16.msra.mxu0 0
      %571 = vmatpush.bf16.msra.mxu0 0
      %572 = vmatpush.bf16.msra.mxu0 0
      %573 = vmatpush.bf16.msra.mxu0 0
      %574 = vmatpush.bf16.msra.mxu0 0
      %575 = vmatpush.bf16.msra.mxu0 %v563
      %576 = vmatmul.bf16.gmra.mxu0 %v566
      %v577 = vpop.f32.mrf.mxu0
      %v578 = vadd.f32 %v557, %v577
      %v579 = vpop.f32.mrf.mxu0
      %v580 = vadd.f32 %v557, %v579
      %581 = vdwg.mxu0
      %v582 = vld [vmem:[%s4] sm:$0xf]
      %v583 = vld [vmem:[%s4 + $0x4] sm:$0xf]
      %v584 = vld [vmem:[%s6] sm:$0x1]
      %v586 = vperm.slane %v584, 0
      %v590 = vunpack.c.l.b16 %v582
      %v591 = vunpack.c.l.b16 %v583
      %v592 = vpack.c.b16 %v591, %v590
      %594 = vmatpush.bf16.msra.mxu0 0
      %595 = vmatpush.bf16.msra.mxu0 0
      %596 = vmatpush.bf16.msra.mxu0 0
      %597 = vmatpush.bf16.msra.mxu0 0
      %598 = vmatpush.bf16.msra.mxu0 0
      %599 = vmatpush.bf16.msra.mxu0 0
      %600 = vmatpush.bf16.msra.mxu0 0
      %601 = vmatpush.bf16.msra.mxu0 %v592
      %602 = vmatmul.bf16.gmra.mxu0 %v566
      %v603 = vpop.f32.mrf.mxu0
      %v604 = vadd.f32 %v586, %v603
      %v605 = vpop.f32.mrf.mxu0
      %v606 = vadd.f32 %v586, %v605
      %607 = vdwg.mxu0
      %v608 = vxor.u32 %v604, 2147483648
      %v609 = vxor.u32 %v606, 2147483648
      %v610 = vmul.f32 %v608, 1.442695
      %v611 = vpow.pop %v610
      %v612 = vmul.f32 %v609, 1.442695
      %v613 = vpow.pop %v612
      %v614 = vadd.f32 %v611, 1.0
      %v615 = vadd.f32 %v613, 1.0
      %v616 = vrcp.pop %v614
      %v617 = vmul.f32 %v614, %v616
      %v618 = vsub.f32 1.0, %v617
      %v619 = vmul.f32 %v616, %v618
      %v620 = vadd.f32 %v616, %v619
      %vm621 = vweird.f32 %v614
      %vm622 = vweird.f32 %v616
      %vm623 = vmor %vm621, %vm622
      %v624 = vsel %vm623, %v616, %v620
      %v625 = vand.u32 2147483647, %v614
      %vm626 = vcmp.eq.f32.partialorder %v625, 8.507059e+37
      %v627 = vand.u32 %v614, 2147483648
      %v628 = vor.u32 1.1754944e-38, %v627
      %v629 = vsel %vm626, %v628, %v624
      %v630 = vmul.f32 1.0, %v629
      %v631 = vrcp.pop %v615
      %v632 = vmul.f32 %v615, %v631
      %v633 = vsub.f32 1.0, %v632
      %v634 = vmul.f32 %v631, %v633
      %v635 = vadd.f32 %v631, %v634
      %vm636 = vweird.f32 %v615
      %vm637 = vweird.f32 %v631
      %vm638 = vmor %vm636, %vm637
      %v639 = vsel %vm638, %v631, %v635
      %v640 = vand.u32 2147483647, %v615
      %vm641 = vcmp.eq.f32.partialorder %v640, 8.507059e+37
      %v642 = vand.u32 %v615, 2147483648
      %v643 = vor.u32 1.1754944e-38, %v642
      %v644 = vsel %vm641, %v643, %v639
      %v645 = vmul.f32 1.0, %v644
      %v646 = vmul.f32 %v578, %v630
      %v647 = vmul.f32 %v580, %v645
      %v648 = vld [vmem:[%s7] sm:$0x7]
      %vm649 = vcmask 261120
      %650 = vst.msk [vmem:[#allocation2 + $0x8] sm:$0xff] %vm649, %v646
      %651 = vst.msk [vmem:[#allocation2 + $0x10] sm:$0xff] %vm649, %v647
      %v652 = vperm.slane %v648, 2
      %v653 = vmul.f32 %v646, %v652
      %v654 = vmul.f32 %v647, %v652
      %v655 = vld [vmem:[%s8] sm:$0x1]
      %v657 = vperm.slane %v655, 0
      %v659 = vadd.f32 %v653, %v657
      %v660 = vadd.f32 %v654, %v657
      %v661 = vld [vmem:[#allocation2 + $0x6] sm:$0xff]
      %v662 = vld [vmem:[#allocation2 + $0xe] sm:$0xff]
      %v663 = vperm.slane %v648, 0
      %v664 = vmul.f32 %v661, %v663
      %v665 = vmul.f32 %v662, %v663
      %v666 = vadd.f32 %v659, %v664
      %v667 = vadd.f32 %v660, %v665
      %v668 = vld [vmem:[#allocation2 + $0x7] sm:$0xff]
      %v669 = vld [vmem:[#allocation2 + $0xf] sm:$0xff]
      %v670 = vperm.slane %v648, 1
      %v671 = vmul.f32 %v668, %v670
      %v672 = vmul.f32 %v669, %v670
      %v673 = vadd.f32 %v666, %v671
      %v674 = vadd.f32 %v667, %v672
      %v675 = vld [vmem:[#allocation2 + $0x16] sm:$0x3]
      %vm676 = vcmask 254976
      %677 = vst.msk [vmem:[#allocation2 + $0x6] sm:$0x3] %vm676, %v675
      %v678 = vsel %vm649, %v673, 0.0
      %679 = vadd.xlane.f32.xlu0 %v678
      %v680 = vpop.xlane.xlu0 %679
      %v681 = vsel %vm649, %v674, 0.0
      %682 = vadd.xlane.f32.xlu0 %v681
      %v683 = vpop.xlane.xlu0 %682
      %v684 = vmul.f32 %v680, 0.03125
      %v685 = vmul.f32 %v683, 0.03125
      %v686 = vmul.f32 %v673, %v673
      %v687 = vmul.f32 %v674, %v674
      %v688 = vsel %vm649, %v686, 0.0
      %689 = vadd.xlane.f32.xlu0 %v688
      %v690 = vpop.xlane.xlu0 %689
      %v691 = vsel %vm649, %v687, 0.0
      %692 = vadd.xlane.f32.xlu0 %v691
      %v693 = vpop.xlane.xlu0 %692
      %v694 = vmul.f32 %v690, 0.03125
      %v695 = vmul.f32 %v693, 0.03125
      %v696 = vmul.f32 %v684, %v684
      %v697 = vmul.f32 %v685, %v685
      %v698 = vsub.f32 %v694, %v696
      %v699 = vsub.f32 %v695, %v697
      %v700 = vmax.f32 %v698, 0.0
      %v701 = vmax.f32 %v699, 0.0
      %v702 = vsub.f32 %v673, %v684
      %v703 = vsub.f32 %v674, %v685
      %v704 = vadd.f32 %v700, 1e-05
      %v705 = vadd.f32 %v701, 1e-05
      %v706 = vrsqrt.pop %v704
      %v707 = vmul.f32 %v706, %v704
      %v708 = vmul.f32 %v707, %v706
      %v709 = vmul.f32 0.5, %v708
      %v710 = vsub.f32 1.5, %v709
      %v711 = vmul.f32 %v706, %v710
      %vm712 = vweird.f32 %v704
      %vm713 = vweird.f32 %v706
      %vm714 = vmor %vm712, %vm713
      %v715 = vsel %vm714, %v706, %v711
      %v716 = vrsqrt.pop %v705
      %v717 = vmul.f32 %v716, %v705
      %v718 = vmul.f32 %v717, %v716
      %v719 = vmul.f32 0.5, %v718
      %v720 = vsub.f32 1.5, %v719
      %v721 = vmul.f32 %v716, %v720
      %vm722 = vweird.f32 %v705
      %vm723 = vweird.f32 %v716
      %vm724 = vmor %vm722, %vm723
      %v725 = vsel %vm724, %v716, %v721
      %v726 = vmul.f32 %v702, %v715
      %v727 = vmul.f32 %v703, %v725
      %v728 = vld [vmem:[%s9] sm:$0x1]
      %v730 = vperm.slane %v728, 0
      %v732 = vmul.f32 %v726, %v730
      %v733 = vmul.f32 %v727, %v730
      %v734 = vld [vmem:[%s10] sm:$0x1]
      %v736 = vperm.slane %v734, 0
      %v738 = vadd.f32 %v732, %v736
      %v739 = vadd.f32 %v733, %v736
      %v740 = vxor.u32 %v738, 2147483648
      %v741 = vxor.u32 %v739, 2147483648
      %v742 = vmul.f32 %v740, 1.442695
      %v743 = vpow.pop %v742
      %v744 = vmul.f32 %v741, 1.442695
      %v745 = vpow.pop %v744
      %v746 = vadd.f32 %v743, 1.0
      %v747 = vadd.f32 %v745, 1.0
      %v748 = vrcp.pop %v746
      %v749 = vmul.f32 %v746, %v748
      %v750 = vsub.f32 1.0, %v749
      %v751 = vmul.f32 %v748, %v750
      %v752 = vadd.f32 %v748, %v751
      %vm753 = vweird.f32 %v746
      %vm754 = vweird.f32 %v748
      %vm755 = vmor %vm753, %vm754
      %v756 = vsel %vm755, %v748, %v752
      %v757 = vand.u32 2147483647, %v746
      %vm758 = vcmp.eq.f32.partialorder %v757, 8.507059e+37
      %v759 = vand.u32 %v746, 2147483648
      %v760 = vor.u32 1.1754944e-38, %v759
      %v761 = vsel %vm758, %v760, %v756
      %v762 = vmul.f32 1.0, %v761
      %v763 = vrcp.pop %v747
      %v764 = vmul.f32 %v747, %v763
      %v765 = vsub.f32 1.0, %v764
      %v766 = vmul.f32 %v763, %v765
      %v767 = vadd.f32 %v763, %v766
      %vm768 = vweird.f32 %v747
      %vm769 = vweird.f32 %v763
      %vm770 = vmor %vm768, %vm769
      %v771 = vsel %vm770, %v763, %v767
      %v772 = vand.u32 2147483647, %v747
      %vm773 = vcmp.eq.f32.partialorder %v772, 8.507059e+37
      %v774 = vand.u32 %v747, 2147483648
      %v775 = vor.u32 1.1754944e-38, %v774
      %v776 = vsel %vm773, %v775, %v771
      %v777 = vmul.f32 1.0, %v776
      %v778 = vmul.f32 %v738, %v762
      %v779 = vmul.f32 %v739, %v777
      %v780 = vpack.c.bf16 %v779, %v778
      %v781 = vld [vmem:[%s11] sm:$0xf]
      %v782 = vld [vmem:[%s11 + $0x4] sm:$0xf]
      %v783 = vld [vmem:[%s11 + $0x8] sm:$0xf]
      %v784 = vld [vmem:[%s11 + $0xc] sm:$0xf]
      %v785 = vld [vmem:[%s12] sm:$0x1]
      %v787 = vperm.slane %v785, 0
      %v793 = vunpack.c.l.b16 %v781
      %v794 = vunpack.c.l.b16 %v782
      %v795 = vunpack.c.l.b16 %v783
      %v796 = vunpack.c.l.b16 %v784
      %v797 = vpack.c.b16 %v794, %v793
      %v798 = vpack.c.b16 %v796, %v795
      %v802 = vsel %vm649, %v780, 0
      %804 = vmatpush.bf16.msra.mxu0 0
      %805 = vmatpush.bf16.msra.mxu0 0
      %806 = vmatpush.bf16.msra.mxu0 0
      %807 = vmatpush.bf16.msra.mxu0 0
      %808 = vmatpush.bf16.msra.mxu0 0
      %809 = vmatpush.bf16.msra.mxu0 0
      %810 = vmatpush.bf16.msra.mxu0 %v798
      %811 = vmatpush.bf16.msra.mxu0 %v797
      %812 = vmatmul.bf16.gmra.mxu0 %v802
      %v813 = vpop.f32.mrf.mxu0
      %v814 = vadd.f32 %v787, %v813
      %v815 = vpop.f32.mrf.mxu0
      %v816 = vadd.f32 %v787, %v815
      %817 = vdwg.mxu0
      %818 = vst.msk [vmem:[%s478] sm:$0xff] %vm489, %v814
      %819 = vst.msk [vmem:[%s478 + $0x8] sm:$0xff] %vm489, %v816
      %s820 = smul.u32 2, %s29
      %p821 = scmp.lt.s32.totalorder %s28, 1
      %s822 = scalar_select %p821, %s28, 1
      %p823 = scmp.lt.s32.totalorder %s820, 3
      %s824 = scalar_select %p823, %s820, 3
      %s825 = smul.addr %s822, 4
      %s826 = sadd.s32 %s824, %s825
      %s827 = smul.addr %s826, 8
      %s828 = scalar_lea.vmem %s13, %s827
      // Predicated region
      $region77: #{tpu_custom_call.1} parent=71 // pred_check
        %p829 = pneg %p336
      $region78: #{tpu_custom_call.1} parent=71 // pred_check_branch
        %831 = sbr.rel (%p829) target = $region80
      $region79: #{tpu_custom_call.1} parent=71 // pred_region
        %s832 = smul.u32 2, %s29
      $region80: #{tpu_custom_call.1} parent=71 // pred_fallthru
        _
    $region72: #{tpu_custom_call.1} parent=5 // pred_fallthru
      _
    %p833 = scmp.le.s32.totalorder 2, %s19
    // Predicated region
    $region81: #{tpu_custom_call.1} parent=5 // pred_check
      %p834 = pneg %p833
    $region82: #{tpu_custom_call.1} parent=5 // pred_check_branch
      %836 = sbr.rel (%p834) target = $region84
    $region83: #{tpu_custom_call.1} parent=5 // pred_region
      %s837 = ssub.s32 %s19, 2
      // Predicated region
      $region85: #{tpu_custom_call.1} parent=83 // pred_check
        %p838 = pneg %p342
      $region86: #{tpu_custom_call.1} parent=83 // pred_check_branch
        %840 = sbr.rel (%p838) target = $region88
      $region87: #{tpu_custom_call.1} parent=83 // pred_region
        %s841 = smul.u32 2, %s31
        %p842 = scmp.lt.s32.totalorder %s30, 1
        %s843 = scalar_select %p842, %s30, 1
        %p844 = scmp.lt.s32.totalorder %s841, 3
        %s845 = scalar_select %p844, %s841, 3
        %s846 = smul.addr %s843, 4
        %s847 = sadd.s32 %s845, %s846
        %s848 = smul.addr %s847, 8
        %s849 = scalar_lea.vmem %s13, %s848
      $region88: #{tpu_custom_call.1} parent=83 // pred_fallthru
        _
    $region84: #{tpu_custom_call.1} parent=5 // pred_fallthru
      _
  $region6: #{tpu_custom_call.1} parent=0 // loop_footer
    %s23 = sadd.s32 1, %s19
  $region7: #{tpu_custom_call.1} parent=0 // loop_footer_branch
    %18 = sbr.rel target = $region3
  $region8: #{tpu_custom_call.1} parent=0 // loop_exit
    _

</llo_original>
